<compile_context>
chip_gen: v7x
topology: tpu7x:2x2x1
jax: 0.10.0
libtpu: 0.0.40
codegen_flags: <defaults>
</compile_context>

<pallas_src>
import functools

import jax
import jax.numpy as jnp
from jax.experimental import pallas as pl
from jax.experimental.pallas import tpu as pltpu


# --------------------------------------------------------------------------
# Kernel
# --------------------------------------------------------------------------
def _self_attention_kernel(x_ref, w1t_ref, w2t_ref, o_ref, *, seq_len, flat_out):
    bt, d = x_ref.shape
    bb = bt // seq_len

    xf = x_ref[...]                               # (bb*T, D)  bf16
    w1t = w1t_ref[...]                            # (D, A_pad) bf16
    w2t = w2t_ref[...]                            # (A_pad, D) bf16

    # s[bt, a] = tanh( sum_d x[b,t,d] * W1[a,d] )    (== tanh(W1 @ x^T), transposed)
    s = jnp.tanh(jnp.dot(xf, w1t, preferred_element_type=jnp.float32))   # (bb*T, A_pad) f32

    # logits[bt, d] = sum_a s[bt, a] * W2[d, a]      (== W2 @ score, transposed)
    logits = jnp.dot(s.astype(jnp.bfloat16), w2t,
                     preferred_element_type=jnp.float32)                 # (bb*T, D) f32

    # softmax over T (PyTorch dim=2 of the (B, D, T) layout == axis 1 here)
    logits3 = logits.reshape(bb, seq_len, d)       # f32, sublane-aligned (T % 8 == 0)
    m = jnp.max(logits3, axis=1, keepdims=True)
    e = jnp.exp(logits3 - m)
    denom = jnp.sum(e, axis=1, keepdims=True)
    w = e * pl.reciprocal(denom, approx=True)      # (bb, T, D) f32

    # Rebuild the (bb, T, D) view of x via an f32 sublane-aligned reshape
    # (a bf16 reshape across a 16-row tile is not relied upon), then cast back.
    x3 = xf.astype(jnp.float32).reshape(bb, seq_len, d).astype(jnp.bfloat16)

    # out[b, d, e] = sum_t w[b, t, d] * x[b, t, e]   (== weights @ x)
    out = jnp.einsum("btd,bte->bde", w.astype(jnp.bfloat16), x3,
                     preferred_element_type=jnp.float32)                 # (bb, D, D) f32

    if flat_out:
        # Lane-dense (bb, D*D) output slab: unrolled static stores avoid a
        # minor-dim reshape while keeping the HBM writeback fully contiguous.
        for j in range(d):
            o_ref[:, j * d:(j + 1) * d] = out[:, j, :].astype(o_ref.dtype)
    else:
        o_ref[...] = out.astype(o_ref.dtype)


# --------------------------------------------------------------------------
# VMEM / block-size accounting (tile-padding aware, generation aware)
# --------------------------------------------------------------------------
def _round_up(n, m):
    return ((n + m - 1) // m) * m


def _tile_bytes(shape, itemsize):
    """(sublane,128)-tile-padded VMEM footprint of one buffer."""
    sub = {4: 8, 2: 16, 1: 32}.get(itemsize, 8)
    if len(shape) == 1:
        return _round_up(shape[0] * itemsize, 4 * 128)
    lead = 1
    for s in shape[:-2]:
        lead *= s
    return lead * _round_up(shape[-2], sub) * _round_up(shape[-1], 128) * itemsize


def _vmem_block_bytes(bb, T, D, A_pad, flat_out):
    x_blk = 2 * _tile_bytes((bb * T, D), 2)                    # double-buffered bf16 input
    out_shape = (bb, D * D) if flat_out else (bb, D, D)
    o_blk = 2 * _tile_bytes(out_shape, 4)                      # double-buffered f32 output
    w_blk = 2 * (_tile_bytes((D, A_pad), 2) + _tile_bytes((A_pad, D), 2))
    interm = (_tile_bytes((bb * T, A_pad), 4)                  # s
              + 2 * _tile_bytes((bb, T, D), 4)                 # logits3, e / weights
              + _tile_bytes((bb * T, D), 4)                    # f32 upcast of x
              + _tile_bytes((bb, D, D), 4))                    # pre-store out
    return x_blk + o_blk + w_blk + int(1.5 * interm)


def _vmem_capacity_bytes():
    try:
        return int(pltpu.get_tpu_info().vmem_capacity_bytes)
    except Exception:
        return 64 * 1024 * 1024    # conservative default (v7x per-TensorCore)


def _tensorcores_per_chip():
    try:
        kind = jax.devices()[0].device_kind.lower()
        if "v7" in kind:
            return 2
    except Exception:
        pass
    return 1


def _pick_block_b(B, T, D, A_pad, flat_out, vmem_budget, n_cores):
    divisors = sorted((b for b in range(1, B + 1) if B % b == 0), reverse=True)
    # (8,128) constraint on the flattened out block: sublane dim bb must be a
    # multiple of 8 or equal to the full batch dim.
    shape_ok = [bb for bb in divisors if (not flat_out) or bb == B or bb % 8 == 0]
    fitting = [bb for bb in shape_ok
               if _vmem_block_bytes(bb, T, D, A_pad, flat_out) <= vmem_budget]
    candidates = fitting if fitting else shape_ok[-1:]     # smallest legal as last resort
    if n_cores > 1:
        for bb in candidates:
            steps = B // bb
            if steps >= n_cores and steps % n_cores == 0:
                return bb
    return candidates[0]


# --------------------------------------------------------------------------
# Wrapper
# --------------------------------------------------------------------------
def self_attention(x, w1, w2, *, block_b=None):
    """x: (B, T, D); w1: (A, D); w2: (D, A). Returns (B, D, D) float32."""
    B, T, D = x.shape
    A = w1.shape[0]
    assert w1.shape == (A, D) and w2.shape == (D, A)
    assert T % 8 == 0, "kernel assumes sublane-aligned sequence length (T % 8 == 0)"

    # bf16 inputs: halves the dominant HBM read stream; f32 accumulation in-kernel.
    x_flat = x.reshape(B * T, D).astype(jnp.bfloat16)

    # Zero-pad A to a lane-dense width; padded lanes contribute exactly 0.
    A_pad = _round_up(A, 128)
    w1t = jnp.zeros((D, A_pad), jnp.bfloat16).at[:, :A].set(w1.T.astype(jnp.bfloat16))
    w2t = jnp.zeros((A_pad, D), jnp.bfloat16).at[:A, :].set(w2.T.astype(jnp.bfloat16))

    flat_out = D < 128     # lane-dense flattened output when D is lane-narrow

    # Generation-aware VMEM budget: ~80% of physical (≈51 MiB on v7x,
    # ≈102 MiB on v5e/v6e), leaving headroom for compiler-internal scratch.
    vmem_cap = _vmem_capacity_bytes()
    vmem_budget = vmem_cap - max(vmem_cap // 5, 8 * 1024 * 1024)

    n_cores = _tensorcores_per_chip()
    bb = block_b if block_b is not None else _pick_block_b(
        B, T, D, A_pad, flat_out, vmem_budget, n_cores)
    assert B % bb == 0, f"block_b={bb} must divide batch={B}"
    if flat_out:
        assert bb == B or bb % 8 == 0, "flattened output block needs bb % 8 == 0"

    vmem_limit = int(min(vmem_budget,
                         max(32 * 1024 * 1024,
                             2 * _vmem_block_bytes(bb, T, D, A_pad, flat_out))))

    if flat_out:
        out_struct = jax.ShapeDtypeStruct((B, D * D), jnp.float32)
        out_spec = pl.BlockSpec((bb, D * D), lambda i: (i, 0))
    else:
        out_struct = jax.ShapeDtypeStruct((B, D, D), jnp.float32)
        out_spec = pl.BlockSpec((bb, D, D), lambda i: (i, 0, 0))

    kernel = functools.partial(_self_attention_kernel, seq_len=T, flat_out=flat_out)

    out = pl.pallas_call(
        kernel,
        out_shape=out_struct,
        grid_spec=pltpu.PrefetchScalarGridSpec(
            num_scalar_prefetch=0,
            grid=(B // bb,),
            in_specs=[
                pl.BlockSpec((bb * T, D), lambda i: (i, 0)),    # x batch block (flat, bf16)
                pl.BlockSpec((D, A_pad), lambda i: (0, 0)),     # W1^T (broadcast)
                pl.BlockSpec((A_pad, D), lambda i: (0, 0)),     # W2^T (broadcast)
            ],
            out_specs=out_spec,
        ),
        compiler_params=pltpu.CompilerParams(
            dimension_semantics=("parallel",),   # batch blocks shard across TCs
            vmem_limit_bytes=vmem_limit,
        ),
    )(x_flat, w1t, w2t)

    if flat_out:
        out = out.reshape(B, D, D)
    return out


# --------------------------------------------------------------------------
# Plain-JAX reference (matches the kernel's bf16-MXU precision)
# --------------------------------------------------------------------------
def self_attention_ref(x, w1, w2, mxu_dtype=jnp.bfloat16):
    c = lambda a: a.astype(mxu_dtype)
    xt = jnp.transpose(x, (0, 2, 1))                                     # (B, D, T)
    score = jnp.tanh(jnp.einsum("ad,bdt->bat", c(w1), c(xt),
                                preferred_element_type=jnp.float32))     # (B, A, T)
    logits = jnp.einsum("da,bat->bdt", c(w2), c(score),
                        preferred_element_type=jnp.float32)              # (B, D, T)
    weights = jax.nn.softmax(logits, axis=2)                             # over T
    return jnp.einsum("bdt,bte->bde", c(weights), c(x),
                      preferred_element_type=jnp.float32)                # (B, D, D)


if __name__ == "__main__":
    B, T = 8, 8          # batch, seq
    D, A = 32, 16        # input_dim, alength

    key = jax.random.PRNGKey(0)
    kx, kw1, kw2 = jax.random.split(key, 3)

    x = jax.random.normal(kx, (B, T, D), dtype=jnp.float32)
    # Deterministic parameter init (stand-in for torch.randn in __init__)
    w1 = jax.random.normal(kw1, (A, D), dtype=jnp.float32)
    w2 = jax.random.normal(kw2, (D, A), dtype=jnp.float32)

    out = self_attention(x, w1, w2)        # auto block_b from the VMEM budget
    out = jax.block_until_ready(out)

    ref = self_attention_ref(x, w1, w2)    # bf16-MXU-matched reference
    assert out.shape == (B, D, D)
    max_err = float(jnp.max(jnp.abs(out - ref)))
    assert jnp.allclose(out, ref, atol=2e-2, rtol=2e-2), max_err

    print("KERNEL_OK")
</pallas_src>

<mosaic_0001>
module attributes {stable_mosaic.version = 11 : i64} {
  func.func @_self_attention_kernel(%arg0: i32, %arg1: memref<64x32xbf16, #tpu.memory_space<vmem>>, %arg2: memref<32x128xbf16, #tpu.memory_space<vmem>>, %arg3: memref<128x32xbf16, #tpu.memory_space<vmem>>, %arg4: memref<8x1024xf32, #tpu.memory_space<vmem>>) attributes {dimension_semantics = [#tpu.dimension_semantics<parallel>], iteration_bounds = array<i64: 1>, scalar_prefetch = 0 : i64, scratch_operands = 0 : i64, tpu.core_type = #tpu.core_type<tc>, window_params = [{transform_indices = @transform_0, window_bounds = array<i64: 64, 32>}, {pipeline_mode = #tpu.pipeline_mode<synchronous>, transform_indices = @transform_1, window_bounds = array<i64: 32, 128>}, {pipeline_mode = #tpu.pipeline_mode<synchronous>, transform_indices = @transform_2, window_bounds = array<i64: 128, 32>}, {transform_indices = @transform_3, window_bounds = array<i64: 8, 1024>}]} {
    %c0 = arith.constant 0 : index
    %c0_0 = arith.constant 0 : index
    %0 = vector.load %arg1[%c0, %c0_0] : memref<64x32xbf16, #tpu.memory_space<vmem>>, vector<64x32xbf16>
    %c0_1 = arith.constant 0 : index
    %c0_2 = arith.constant 0 : index
    %1 = vector.load %arg2[%c0_1, %c0_2] : memref<32x128xbf16, #tpu.memory_space<vmem>>, vector<32x128xbf16>
    %c0_3 = arith.constant 0 : index
    %c0_4 = arith.constant 0 : index
    %2 = vector.load %arg3[%c0_3, %c0_4] : memref<128x32xbf16, #tpu.memory_space<vmem>>, vector<128x32xbf16>
    %cst = arith.constant dense<0.000000e+00> : vector<64x128xf32>
    %3 = tpu.matmul %0, %1, %cst {dimension_numbers = #tpu.dot_dimension_numbers<[1], [0], [0], [1], [0, 0, 1, 1], [], []>} : vector<64x32xbf16>, vector<32x128xbf16>, vector<64x128xf32> -> vector<64x128xf32>
    %4 = math.tanh %3 : vector<64x128xf32>
    %5 = arith.truncf %4 : vector<64x128xf32> to vector<64x128xbf16>
    %cst_5 = arith.constant dense<0.000000e+00> : vector<64x32xf32>
    %6 = tpu.matmul %5, %2, %cst_5 {dimension_numbers = #tpu.dot_dimension_numbers<[1], [0], [0], [1], [0, 0, 1, 1], [], []>} : vector<64x128xbf16>, vector<128x32xbf16>, vector<64x32xf32> -> vector<64x32xf32>
    %7 = vector.shape_cast %6 : vector<64x32xf32> to vector<8x8x32xf32>
    %cst_6 = arith.constant dense<0xFF800000> : vector<8x32xf32>
    %8 = vector.multi_reduction <maximumf>, %7, %cst_6 [1] : vector<8x8x32xf32> to vector<8x32xf32>
    %9 = vector.shape_cast %8 : vector<8x32xf32> to vector<8x1x32xf32>
    %10 = vector.broadcast %9 : vector<8x1x32xf32> to vector<8x8x32xf32>
    %11 = arith.subf %7, %10 : vector<8x8x32xf32>
    %12 = math.exp %11 : vector<8x8x32xf32>
    %cst_7 = arith.constant dense<0.000000e+00> : vector<8x32xf32>
    %13 = vector.multi_reduction <add>, %12, %cst_7 [1] : vector<8x8x32xf32> to vector<8x32xf32>
    %14 = vector.shape_cast %13 : vector<8x32xf32> to vector<8x1x32xf32>
    %15 = tpu.reciprocal %14 {approx = true} : vector<8x1x32xf32> -> vector<8x1x32xf32>
    %16 = vector.broadcast %15 : vector<8x1x32xf32> to vector<8x8x32xf32>
    %17 = arith.mulf %12, %16 : vector<8x8x32xf32>
    %18 = arith.extf %0 : vector<64x32xbf16> to vector<64x32xf32>
    %19 = vector.shape_cast %18 : vector<64x32xf32> to vector<8x8x32xf32>
    %20 = arith.truncf %19 : vector<8x8x32xf32> to vector<8x8x32xbf16>
    %21 = arith.truncf %17 : vector<8x8x32xf32> to vector<8x8x32xbf16>
    "tpu.trace_start"() <{level = 10 : i32, message = "btd,bte->bde"}> : () -> ()
    %cst_8 = arith.constant dense<0.000000e+00> : vector<8x32x32xf32>
    %22 = tpu.matmul %21, %20, %cst_8 {dimension_numbers = #tpu.dot_dimension_numbers<[1], [1], [2], [2], [0, 0, 0, 2, 1, 2], [0], [0]>} : vector<8x8x32xbf16>, vector<8x8x32xbf16>, vector<8x32x32xf32> -> vector<8x32x32xf32>
    "tpu.trace_stop"() : () -> ()
    %23 = vector.extract_strided_slice %22 {offsets = [0, 0, 0], sizes = [8, 1, 32], strides = [1, 1, 1]} : vector<8x32x32xf32> to vector<8x1x32xf32>
    %24 = vector.shape_cast %23 : vector<8x1x32xf32> to vector<8x32xf32>
    %c0_9 = arith.constant 0 : index
    %c0_10 = arith.constant 0 : index
    %25 = vector.load %arg4[%c0_9, %c0_10] : memref<8x1024xf32, #tpu.memory_space<vmem>>, vector<8x32xf32>
    tpu.vector_store %arg4[%c0_9, %c0_10], %24 {strides = array<i32>} : memref<8x1024xf32, #tpu.memory_space<vmem>>, vector<8x32xf32>,
    %26 = vector.extract_strided_slice %22 {offsets = [0, 1, 0], sizes = [8, 1, 32], strides = [1, 1, 1]} : vector<8x32x32xf32> to vector<8x1x32xf32>
    %27 = vector.shape_cast %26 : vector<8x1x32xf32> to vector<8x32xf32>
    %c0_11 = arith.constant 0 : index
    %c32 = arith.constant 32 : index
    %28 = vector.load %arg4[%c0_11, %c32] : memref<8x1024xf32, #tpu.memory_space<vmem>>, vector<8x32xf32>
    tpu.vector_store %arg4[%c0_11, %c32], %27 {strides = array<i32>} : memref<8x1024xf32, #tpu.memory_space<vmem>>, vector<8x32xf32>,
    %29 = vector.extract_strided_slice %22 {offsets = [0, 2, 0], sizes = [8, 1, 32], strides = [1, 1, 1]} : vector<8x32x32xf32> to vector<8x1x32xf32>
    %30 = vector.shape_cast %29 : vector<8x1x32xf32> to vector<8x32xf32>
    %c0_12 = arith.constant 0 : index
    %c64 = arith.constant 64 : index
    %31 = vector.load %arg4[%c0_12, %c64] : memref<8x1024xf32, #tpu.memory_space<vmem>>, vector<8x32xf32>
    tpu.vector_store %arg4[%c0_12, %c64], %30 {strides = array<i32>} : memref<8x1024xf32, #tpu.memory_space<vmem>>, vector<8x32xf32>,
    %32 = vector.extract_strided_slice %22 {offsets = [0, 3, 0], sizes = [8, 1, 32], strides = [1, 1, 1]} : vector<8x32x32xf32> to vector<8x1x32xf32>
    %33 = vector.shape_cast %32 : vector<8x1x32xf32> to vector<8x32xf32>
    %c0_13 = arith.constant 0 : index
    %c96 = arith.constant 96 : index
    %34 = vector.load %arg4[%c0_13, %c96] : memref<8x1024xf32, #tpu.memory_space<vmem>>, vector<8x32xf32>
    tpu.vector_store %arg4[%c0_13, %c96], %33 {strides = array<i32>} : memref<8x1024xf32, #tpu.memory_space<vmem>>, vector<8x32xf32>,
    %35 = vector.extract_strided_slice %22 {offsets = [0, 4, 0], sizes = [8, 1, 32], strides = [1, 1, 1]} : vector<8x32x32xf32> to vector<8x1x32xf32>
    %36 = vector.shape_cast %35 : vector<8x1x32xf32> to vector<8x32xf32>
    %c0_14 = arith.constant 0 : index
    %c128 = arith.constant 128 : index
    %37 = vector.load %arg4[%c0_14, %c128] : memref<8x1024xf32, #tpu.memory_space<vmem>>, vector<8x32xf32>
    tpu.vector_store %arg4[%c0_14, %c128], %36 {strides = array<i32>} : memref<8x1024xf32, #tpu.memory_space<vmem>>, vector<8x32xf32>,
    %38 = vector.extract_strided_slice %22 {offsets = [0, 5, 0], sizes = [8, 1, 32], strides = [1, 1, 1]} : vector<8x32x32xf32> to vector<8x1x32xf32>
    %39 = vector.shape_cast %38 : vector<8x1x32xf32> to vector<8x32xf32>
    %c0_15 = arith.constant 0 : index
    %c160 = arith.constant 160 : index
    %40 = vector.load %arg4[%c0_15, %c160] : memref<8x1024xf32, #tpu.memory_space<vmem>>, vector<8x32xf32>
    tpu.vector_store %arg4[%c0_15, %c160], %39 {strides = array<i32>} : memref<8x1024xf32, #tpu.memory_space<vmem>>, vector<8x32xf32>,
    %41 = vector.extract_strided_slice %22 {offsets = [0, 6, 0], sizes = [8, 1, 32], strides = [1, 1, 1]} : vector<8x32x32xf32> to vector<8x1x32xf32>
    %42 = vector.shape_cast %41 : vector<8x1x32xf32> to vector<8x32xf32>
    %c0_16 = arith.constant 0 : index
    %c192 = arith.constant 192 : index
    %43 = vector.load %arg4[%c0_16, %c192] : memref<8x1024xf32, #tpu.memory_space<vmem>>, vector<8x32xf32>
    tpu.vector_store %arg4[%c0_16, %c192], %42 {strides = array<i32>} : memref<8x1024xf32, #tpu.memory_space<vmem>>, vector<8x32xf32>,
    %44 = vector.extract_strided_slice %22 {offsets = [0, 7, 0], sizes = [8, 1, 32], strides = [1, 1, 1]} : vector<8x32x32xf32> to vector<8x1x32xf32>
    %45 = vector.shape_cast %44 : vector<8x1x32xf32> to vector<8x32xf32>
    %c0_17 = arith.constant 0 : index
    %c224 = arith.constant 224 : index
    %46 = vector.load %arg4[%c0_17, %c224] : memref<8x1024xf32, #tpu.memory_space<vmem>>, vector<8x32xf32>
    tpu.vector_store %arg4[%c0_17, %c224], %45 {strides = array<i32>} : memref<8x1024xf32, #tpu.memory_space<vmem>>, vector<8x32xf32>,
    %47 = vector.extract_strided_slice %22 {offsets = [0, 8, 0], sizes = [8, 1, 32], strides = [1, 1, 1]} : vector<8x32x32xf32> to vector<8x1x32xf32>
    %48 = vector.shape_cast %47 : vector<8x1x32xf32> to vector<8x32xf32>
    %c0_18 = arith.constant 0 : index
    %c256 = arith.constant 256 : index
    %49 = vector.load %arg4[%c0_18, %c256] : memref<8x1024xf32, #tpu.memory_space<vmem>>, vector<8x32xf32>
    tpu.vector_store %arg4[%c0_18, %c256], %48 {strides = array<i32>} : memref<8x1024xf32, #tpu.memory_space<vmem>>, vector<8x32xf32>,
    %50 = vector.extract_strided_slice %22 {offsets = [0, 9, 0], sizes = [8, 1, 32], strides = [1, 1, 1]} : vector<8x32x32xf32> to vector<8x1x32xf32>
    %51 = vector.shape_cast %50 : vector<8x1x32xf32> to vector<8x32xf32>
    %c0_19 = arith.constant 0 : index
    %c288 = arith.constant 288 : index
    %52 = vector.load %arg4[%c0_19, %c288] : memref<8x1024xf32, #tpu.memory_space<vmem>>, vector<8x32xf32>
    tpu.vector_store %arg4[%c0_19, %c288], %51 {strides = array<i32>} : memref<8x1024xf32, #tpu.memory_space<vmem>>, vector<8x32xf32>,
    %53 = vector.extract_strided_slice %22 {offsets = [0, 10, 0], sizes = [8, 1, 32], strides = [1, 1, 1]} : vector<8x32x32xf32> to vector<8x1x32xf32>
    %54 = vector.shape_cast %53 : vector<8x1x32xf32> to vector<8x32xf32>
    %c0_20 = arith.constant 0 : index
    %c320 = arith.constant 320 : index
    %55 = vector.load %arg4[%c0_20, %c320] : memref<8x1024xf32, #tpu.memory_space<vmem>>, vector<8x32xf32>
    tpu.vector_store %arg4[%c0_20, %c320], %54 {strides = array<i32>} : memref<8x1024xf32, #tpu.memory_space<vmem>>, vector<8x32xf32>,
    %56 = vector.extract_strided_slice %22 {offsets = [0, 11, 0], sizes = [8, 1, 32], strides = [1, 1, 1]} : vector<8x32x32xf32> to vector<8x1x32xf32>
    %57 = vector.shape_cast %56 : vector<8x1x32xf32> to vector<8x32xf32>
    %c0_21 = arith.constant 0 : index
    %c352 = arith.constant 352 : index
    %58 = vector.load %arg4[%c0_21, %c352] : memref<8x1024xf32, #tpu.memory_space<vmem>>, vector<8x32xf32>
    tpu.vector_store %arg4[%c0_21, %c352], %57 {strides = array<i32>} : memref<8x1024xf32, #tpu.memory_space<vmem>>, vector<8x32xf32>,
    %59 = vector.extract_strided_slice %22 {offsets = [0, 12, 0], sizes = [8, 1, 32], strides = [1, 1, 1]} : vector<8x32x32xf32> to vector<8x1x32xf32>
    %60 = vector.shape_cast %59 : vector<8x1x32xf32> to vector<8x32xf32>
    %c0_22 = arith.constant 0 : index
    %c384 = arith.constant 384 : index
    %61 = vector.load %arg4[%c0_22, %c384] : memref<8x1024xf32, #tpu.memory_space<vmem>>, vector<8x32xf32>
    tpu.vector_store %arg4[%c0_22, %c384], %60 {strides = array<i32>} : memref<8x1024xf32, #tpu.memory_space<vmem>>, vector<8x32xf32>,
    %62 = vector.extract_strided_slice %22 {offsets = [0, 13, 0], sizes = [8, 1, 32], strides = [1, 1, 1]} : vector<8x32x32xf32> to vector<8x1x32xf32>
    %63 = vector.shape_cast %62 : vector<8x1x32xf32> to vector<8x32xf32>
    %c0_23 = arith.constant 0 : index
    %c416 = arith.constant 416 : index
    %64 = vector.load %arg4[%c0_23, %c416] : memref<8x1024xf32, #tpu.memory_space<vmem>>, vector<8x32xf32>
    tpu.vector_store %arg4[%c0_23, %c416], %63 {strides = array<i32>} : memref<8x1024xf32, #tpu.memory_space<vmem>>, vector<8x32xf32>,
    %65 = vector.extract_strided_slice %22 {offsets = [0, 14, 0], sizes = [8, 1, 32], strides = [1, 1, 1]} : vector<8x32x32xf32> to vector<8x1x32xf32>
    %66 = vector.shape_cast %65 : vector<8x1x32xf32> to vector<8x32xf32>
    %c0_24 = arith.constant 0 : index
    %c448 = arith.constant 448 : index
    %67 = vector.load %arg4[%c0_24, %c448] : memref<8x1024xf32, #tpu.memory_space<vmem>>, vector<8x32xf32>
    tpu.vector_store %arg4[%c0_24, %c448], %66 {strides = array<i32>} : memref<8x1024xf32, #tpu.memory_space<vmem>>, vector<8x32xf32>,
    %68 = vector.extract_strided_slice %22 {offsets = [0, 15, 0], sizes = [8, 1, 32], strides = [1, 1, 1]} : vector<8x32x32xf32> to vector<8x1x32xf32>
    %69 = vector.shape_cast %68 : vector<8x1x32xf32> to vector<8x32xf32>
    %c0_25 = arith.constant 0 : index
    %c480 = arith.constant 480 : index
    %70 = vector.load %arg4[%c0_25, %c480] : memref<8x1024xf32, #tpu.memory_space<vmem>>, vector<8x32xf32>
    tpu.vector_store %arg4[%c0_25, %c480], %69 {strides = array<i32>} : memref<8x1024xf32, #tpu.memory_space<vmem>>, vector<8x32xf32>,
    %71 = vector.extract_strided_slice %22 {offsets = [0, 16, 0], sizes = [8, 1, 32], strides = [1, 1, 1]} : vector<8x32x32xf32> to vector<8x1x32xf32>
    %72 = vector.shape_cast %71 : vector<8x1x32xf32> to vector<8x32xf32>
    %c0_26 = arith.constant 0 : index
    %c512 = arith.constant 512 : index
    %73 = vector.load %arg4[%c0_26, %c512] : memref<8x1024xf32, #tpu.memory_space<vmem>>, vector<8x32xf32>
    tpu.vector_store %arg4[%c0_26, %c512], %72 {strides = array<i32>} : memref<8x1024xf32, #tpu.memory_space<vmem>>, vector<8x32xf32>,
    %74 = vector.extract_strided_slice %22 {offsets = [0, 17, 0], sizes = [8, 1, 32], strides = [1, 1, 1]} : vector<8x32x32xf32> to vector<8x1x32xf32>
    %75 = vector.shape_cast %74 : vector<8x1x32xf32> to vector<8x32xf32>
    %c0_27 = arith.constant 0 : index
    %c544 = arith.constant 544 : index
    %76 = vector.load %arg4[%c0_27, %c544] : memref<8x1024xf32, #tpu.memory_space<vmem>>, vector<8x32xf32>
    tpu.vector_store %arg4[%c0_27, %c544], %75 {strides = array<i32>} : memref<8x1024xf32, #tpu.memory_space<vmem>>, vector<8x32xf32>,
    %77 = vector.extract_strided_slice %22 {offsets = [0, 18, 0], sizes = [8, 1, 32], strides = [1, 1, 1]} : vector<8x32x32xf32> to vector<8x1x32xf32>
    %78 = vector.shape_cast %77 : vector<8x1x32xf32> to vector<8x32xf32>
    %c0_28 = arith.constant 0 : index
    %c576 = arith.constant 576 : index
    %79 = vector.load %arg4[%c0_28, %c576] : memref<8x1024xf32, #tpu.memory_space<vmem>>, vector<8x32xf32>
    tpu.vector_store %arg4[%c0_28, %c576], %78 {strides = array<i32>} : memref<8x1024xf32, #tpu.memory_space<vmem>>, vector<8x32xf32>,
    %80 = vector.extract_strided_slice %22 {offsets = [0, 19, 0], sizes = [8, 1, 32], strides = [1, 1, 1]} : vector<8x32x32xf32> to vector<8x1x32xf32>
    %81 = vector.shape_cast %80 : vector<8x1x32xf32> to vector<8x32xf32>
    %c0_29 = arith.constant 0 : index
    %c608 = arith.constant 608 : index
    %82 = vector.load %arg4[%c0_29, %c608] : memref<8x1024xf32, #tpu.memory_space<vmem>>, vector<8x32xf32>
    tpu.vector_store %arg4[%c0_29, %c608], %81 {strides = array<i32>} : memref<8x1024xf32, #tpu.memory_space<vmem>>, vector<8x32xf32>,
    %83 = vector.extract_strided_slice %22 {offsets = [0, 20, 0], sizes = [8, 1, 32], strides = [1, 1, 1]} : vector<8x32x32xf32> to vector<8x1x32xf32>
    %84 = vector.shape_cast %83 : vector<8x1x32xf32> to vector<8x32xf32>
    %c0_30 = arith.constant 0 : index
    %c640 = arith.constant 640 : index
    %85 = vector.load %arg4[%c0_30, %c640] : memref<8x1024xf32, #tpu.memory_space<vmem>>, vector<8x32xf32>
    tpu.vector_store %arg4[%c0_30, %c640], %84 {strides = array<i32>} : memref<8x1024xf32, #tpu.memory_space<vmem>>, vector<8x32xf32>,
    %86 = vector.extract_strided_slice %22 {offsets = [0, 21, 0], sizes = [8, 1, 32], strides = [1, 1, 1]} : vector<8x32x32xf32> to vector<8x1x32xf32>
    %87 = vector.shape_cast %86 : vector<8x1x32xf32> to vector<8x32xf32>
    %c0_31 = arith.constant 0 : index
    %c672 = arith.constant 672 : index
    %88 = vector.load %arg4[%c0_31, %c672] : memref<8x1024xf32, #tpu.memory_space<vmem>>, vector<8x32xf32>
    tpu.vector_store %arg4[%c0_31, %c672], %87 {strides = array<i32>} : memref<8x1024xf32, #tpu.memory_space<vmem>>, vector<8x32xf32>,
    %89 = vector.extract_strided_slice %22 {offsets = [0, 22, 0], sizes = [8, 1, 32], strides = [1, 1, 1]} : vector<8x32x32xf32> to vector<8x1x32xf32>
    %90 = vector.shape_cast %89 : vector<8x1x32xf32> to vector<8x32xf32>
    %c0_32 = arith.constant 0 : index
    %c704 = arith.constant 704 : index
    %91 = vector.load %arg4[%c0_32, %c704] : memref<8x1024xf32, #tpu.memory_space<vmem>>, vector<8x32xf32>
    tpu.vector_store %arg4[%c0_32, %c704], %90 {strides = array<i32>} : memref<8x1024xf32, #tpu.memory_space<vmem>>, vector<8x32xf32>,
    %92 = vector.extract_strided_slice %22 {offsets = [0, 23, 0], sizes = [8, 1, 32], strides = [1, 1, 1]} : vector<8x32x32xf32> to vector<8x1x32xf32>
    %93 = vector.shape_cast %92 : vector<8x1x32xf32> to vector<8x32xf32>
    %c0_33 = arith.constant 0 : index
    %c736 = arith.constant 736 : index
    %94 = vector.load %arg4[%c0_33, %c736] : memref<8x1024xf32, #tpu.memory_space<vmem>>, vector<8x32xf32>
    tpu.vector_store %arg4[%c0_33, %c736], %93 {strides = array<i32>} : memref<8x1024xf32, #tpu.memory_space<vmem>>, vector<8x32xf32>,
    %95 = vector.extract_strided_slice %22 {offsets = [0, 24, 0], sizes = [8, 1, 32], strides = [1, 1, 1]} : vector<8x32x32xf32> to vector<8x1x32xf32>
    %96 = vector.shape_cast %95 : vector<8x1x32xf32> to vector<8x32xf32>
    %c0_34 = arith.constant 0 : index
    %c768 = arith.constant 768 : index
    %97 = vector.load %arg4[%c0_34, %c768] : memref<8x1024xf32, #tpu.memory_space<vmem>>, vector<8x32xf32>
    tpu.vector_store %arg4[%c0_34, %c768], %96 {strides = array<i32>} : memref<8x1024xf32, #tpu.memory_space<vmem>>, vector<8x32xf32>,
    %98 = vector.extract_strided_slice %22 {offsets = [0, 25, 0], sizes = [8, 1, 32], strides = [1, 1, 1]} : vector<8x32x32xf32> to vector<8x1x32xf32>
    %99 = vector.shape_cast %98 : vector<8x1x32xf32> to vector<8x32xf32>
    %c0_35 = arith.constant 0 : index
    %c800 = arith.constant 800 : index
    %100 = vector.load %arg4[%c0_35, %c800] : memref<8x1024xf32, #tpu.memory_space<vmem>>, vector<8x32xf32>
    tpu.vector_store %arg4[%c0_35, %c800], %99 {strides = array<i32>} : memref<8x1024xf32, #tpu.memory_space<vmem>>, vector<8x32xf32>,
    %101 = vector.extract_strided_slice %22 {offsets = [0, 26, 0], sizes = [8, 1, 32], strides = [1, 1, 1]} : vector<8x32x32xf32> to vector<8x1x32xf32>
    %102 = vector.shape_cast %101 : vector<8x1x32xf32> to vector<8x32xf32>
    %c0_36 = arith.constant 0 : index
    %c832 = arith.constant 832 : index
    %103 = vector.load %arg4[%c0_36, %c832] : memref<8x1024xf32, #tpu.memory_space<vmem>>, vector<8x32xf32>
    tpu.vector_store %arg4[%c0_36, %c832], %102 {strides = array<i32>} : memref<8x1024xf32, #tpu.memory_space<vmem>>, vector<8x32xf32>,
    %104 = vector.extract_strided_slice %22 {offsets = [0, 27, 0], sizes = [8, 1, 32], strides = [1, 1, 1]} : vector<8x32x32xf32> to vector<8x1x32xf32>
    %105 = vector.shape_cast %104 : vector<8x1x32xf32> to vector<8x32xf32>
    %c0_37 = arith.constant 0 : index
    %c864 = arith.constant 864 : index
    %106 = vector.load %arg4[%c0_37, %c864] : memref<8x1024xf32, #tpu.memory_space<vmem>>, vector<8x32xf32>
    tpu.vector_store %arg4[%c0_37, %c864], %105 {strides = array<i32>} : memref<8x1024xf32, #tpu.memory_space<vmem>>, vector<8x32xf32>,
    %107 = vector.extract_strided_slice %22 {offsets = [0, 28, 0], sizes = [8, 1, 32], strides = [1, 1, 1]} : vector<8x32x32xf32> to vector<8x1x32xf32>
    %108 = vector.shape_cast %107 : vector<8x1x32xf32> to vector<8x32xf32>
    %c0_38 = arith.constant 0 : index
    %c896 = arith.constant 896 : index
    %109 = vector.load %arg4[%c0_38, %c896] : memref<8x1024xf32, #tpu.memory_space<vmem>>, vector<8x32xf32>
    tpu.vector_store %arg4[%c0_38, %c896], %108 {strides = array<i32>} : memref<8x1024xf32, #tpu.memory_space<vmem>>, vector<8x32xf32>,
    %110 = vector.extract_strided_slice %22 {offsets = [0, 29, 0], sizes = [8, 1, 32], strides = [1, 1, 1]} : vector<8x32x32xf32> to vector<8x1x32xf32>
    %111 = vector.shape_cast %110 : vector<8x1x32xf32> to vector<8x32xf32>
    %c0_39 = arith.constant 0 : index
    %c928 = arith.constant 928 : index
    %112 = vector.load %arg4[%c0_39, %c928] : memref<8x1024xf32, #tpu.memory_space<vmem>>, vector<8x32xf32>
    tpu.vector_store %arg4[%c0_39, %c928], %111 {strides = array<i32>} : memref<8x1024xf32, #tpu.memory_space<vmem>>, vector<8x32xf32>,
    %113 = vector.extract_strided_slice %22 {offsets = [0, 30, 0], sizes = [8, 1, 32], strides = [1, 1, 1]} : vector<8x32x32xf32> to vector<8x1x32xf32>
    %114 = vector.shape_cast %113 : vector<8x1x32xf32> to vector<8x32xf32>
    %c0_40 = arith.constant 0 : index
    %c960 = arith.constant 960 : index
    %115 = vector.load %arg4[%c0_40, %c960] : memref<8x1024xf32, #tpu.memory_space<vmem>>, vector<8x32xf32>
    tpu.vector_store %arg4[%c0_40, %c960], %114 {strides = array<i32>} : memref<8x1024xf32, #tpu.memory_space<vmem>>, vector<8x32xf32>,
    %116 = vector.extract_strided_slice %22 {offsets = [0, 31, 0], sizes = [8, 1, 32], strides = [1, 1, 1]} : vector<8x32x32xf32> to vector<8x1x32xf32>
    %117 = vector.shape_cast %116 : vector<8x1x32xf32> to vector<8x32xf32>
    %c0_41 = arith.constant 0 : index
    %c992 = arith.constant 992 : index
    %118 = vector.load %arg4[%c0_41, %c992] : memref<8x1024xf32, #tpu.memory_space<vmem>>, vector<8x32xf32>
    tpu.vector_store %arg4[%c0_41, %c992], %117 {strides = array<i32>} : memref<8x1024xf32, #tpu.memory_space<vmem>>, vector<8x32xf32>,
    return
  }
  func.func @transform_0(%arg0: i32) -> (i32, i32) {
    %c0_i32 = arith.constant 0 : i32
    %c0_i32_0 = arith.constant 0 : i32
    return %arg0, %c0_i32 : i32, i32
  }
  func.func @transform_1(%arg0: i32) -> (i32, i32) {
    %c0_i32 = arith.constant 0 : i32
    %c0_i32_0 = arith.constant 0 : i32
    %c0_i32_1 = arith.constant 0 : i32
    return %c0_i32, %c0_i32_0 : i32, i32
  }
  func.func @transform_2(%arg0: i32) -> (i32, i32) {
    %c0_i32 = arith.constant 0 : i32
    %c0_i32_0 = arith.constant 0 : i32
    %c0_i32_1 = arith.constant 0 : i32
    return %c0_i32, %c0_i32_0 : i32, i32
  }
  func.func @transform_3(%arg0: i32) -> (i32, i32) {
    %c0_i32 = arith.constant 0 : i32
    %c0_i32_0 = arith.constant 0 : i32
    return %arg0, %c0_i32 : i32, i32
  }
}

</mosaic_0001>

<llo_original>
// kernel: tpu_custom_call.1
$region0: #{tpu_custom_call.1}
  #allocation0 [shape = 'u32[]', space=smem, size = 0x4, offset = 0x4, fixed_abs, tag = 'smem constant byte address 0x4 - core index']
  #allocation1 [shape = 'u32[144,128]{1,0:T(1,128)}', space=vmem, size = 0x12000, scoped, tag = 'internal scratch']
  %s0 = inlined_call_operand.vmem [shape: bf16[64,32], index: 0, kind: input, shape index: {}]
  %s1 = inlined_call_operand.vmem [shape: bf16[32,128], index: 1, kind: input, shape index: {}]
  %s2 = inlined_call_operand.vmem [shape: bf16[128,32], index: 2, kind: input, shape index: {}]
  %s3 = inlined_call_operand.hbm [shape: f32[8,1024], index: 3, kind: output, shape index: {}]
  %s4 = sld [smem:[#allocation0]]
  $region22: #{tpu_custom_call.1} parent=0
    _
  %s6 = ssub.s32 1, %s4
  %s7 = scalar_select 0, %s6, %s4
  $region1: #{tpu_custom_call.1} parent=0
    #allocation2 [shape = 'u8[32768]{0}', space=vmem, size = 0x8000, scoped, tag = 'output window, operand 0, single buffered']
    #allocation3 [shape = 's32[1]{0}', space=sflag, size = 0x4, scoped, tag = 'scoped memory for tpu_custom_call.1']
    %8 = vsyncpa [#allocation3], 0
    // Predicated region
    $region2: #{tpu_custom_call.1} parent=1 // pred_check
      _
    $region3: #{tpu_custom_call.1} parent=1 // pred_check_branch
      %10 = sbr.rel (0) target = $region5
    $region4: #{tpu_custom_call.1} parent=1 // pred_region
      _
    $region5: #{tpu_custom_call.1} parent=1 // pred_fallthru
      _
    // Predicated region
    $region6: #{tpu_custom_call.1} parent=1 // pred_check
      _
    $region7: #{tpu_custom_call.1} parent=1 // pred_check_branch
      %12 = sbr.rel (0) target = $region9
    $region8: #{tpu_custom_call.1} parent=1 // pred_region
      _
    $region9: #{tpu_custom_call.1} parent=1 // pred_fallthru
      _
    // Predicated region
    $region10: #{tpu_custom_call.1} parent=1 // pred_check
      _
    $region11: #{tpu_custom_call.1} parent=1 // pred_check_branch
      %14 = sbr.rel (0) target = $region13
    $region12: #{tpu_custom_call.1} parent=1 // pred_region
      _
    $region13: #{tpu_custom_call.1} parent=1 // pred_fallthru
      _
    %v16 = vld [vmem:[%s0] sm:$0xf]
    %v17 = vld [vmem:[%s0 + $0x4] sm:$0xf]
    %v18 = vld [vmem:[%s0 + $0x8] sm:$0xf]
    %v19 = vld [vmem:[%s0 + $0xc] sm:$0xf]
    %v20 = vld [vmem:[%s0 + $0x10] sm:$0xf]
    %v21 = vld [vmem:[%s0 + $0x14] sm:$0xf]
    %v22 = vld [vmem:[%s0 + $0x18] sm:$0xf]
    %v23 = vld [vmem:[%s0 + $0x1c] sm:$0xf]
    %v24 = vld [vmem:[%s1] sm:$0xf]
    %v25 = vld [vmem:[%s1 + $0x4] sm:$0xf]
    %v26 = vld [vmem:[%s1 + $0x8] sm:$0xf]
    %v27 = vld [vmem:[%s1 + $0xc] sm:$0xf]
    %v28 = vld [vmem:[%s2] sm:$0xf]
    %v29 = vld [vmem:[%s2 + $0x4] sm:$0xf]
    %v30 = vld [vmem:[%s2 + $0x8] sm:$0xf]
    %v31 = vld [vmem:[%s2 + $0xc] sm:$0xf]
    %v32 = vld [vmem:[%s2 + $0x10] sm:$0xf]
    %v33 = vld [vmem:[%s2 + $0x14] sm:$0xf]
    %v34 = vld [vmem:[%s2 + $0x18] sm:$0xf]
    %v35 = vld [vmem:[%s2 + $0x1c] sm:$0xf]
    %v36 = vld [vmem:[%s2 + $0x20] sm:$0xf]
    %v37 = vld [vmem:[%s2 + $0x24] sm:$0xf]
    %v38 = vld [vmem:[%s2 + $0x28] sm:$0xf]
    %v39 = vld [vmem:[%s2 + $0x2c] sm:$0xf]
    %v40 = vld [vmem:[%s2 + $0x30] sm:$0xf]
    %v41 = vld [vmem:[%s2 + $0x34] sm:$0xf]
    %v42 = vld [vmem:[%s2 + $0x38] sm:$0xf]
    %v43 = vld [vmem:[%s2 + $0x3c] sm:$0xf]
    %v52 = vunpack.c.l.b16 %v16
    %v53 = vunpack.c.l.b16 %v17
    %v54 = vunpack.c.l.b16 %v18
    %v55 = vunpack.c.l.b16 %v19
    %v56 = vunpack.c.l.b16 %v20
    %v57 = vunpack.c.l.b16 %v21
    %v58 = vunpack.c.l.b16 %v22
    %v59 = vunpack.c.l.b16 %v23
    %v60 = vpack.c.b16 %v53, %v52
    %v61 = vpack.c.b16 %v55, %v54
    %v62 = vpack.c.b16 %v57, %v56
    %v63 = vpack.c.b16 %v59, %v58
    %v68 = vunpack.c.l.b16 %v24
    %v69 = vunpack.c.l.b16 %v25
    %v70 = vunpack.c.l.b16 %v26
    %v71 = vunpack.c.l.b16 %v27
    %v72 = vpack.c.b16 %v69, %v68
    %v73 = vpack.c.b16 %v71, %v70
    %vm76 = vcmask 261120
    %v78 = vsel %vm76, %v60, 0
    %v81 = vsel %vm76, %v61, 0
    %v84 = vsel %vm76, %v62, 0
    %v87 = vsel %vm76, %v63, 0
    %89 = vmatprep.subr.bf16.mxu0 0
    %90 = vmatpush1.bf16.msra.mxu0 %v72
    %91 = vmatprep.subr.bf16.mxu0 0
    %92 = vmatpush1.bf16.msra.mxu0 %v73
    %93 = vmatprep.subr.bf16.mxu0 0
    %94 = vmatpush1.bf16.msra.mxu0 0
    %95 = vmatprep.subr.bf16.mxu0 0
    %96 = vmatpush1.bf16.msra.mxu0 0
    %97 = vmatprep.subr.bf16.mxu0 0
    %98 = vmatpush1.bf16.msra.mxu0 0
    %99 = vmatprep.subr.bf16.mxu0 0
    %100 = vmatpush1.bf16.msra.mxu0 0
    %101 = vmatprep.subr.bf16.mxu0 0
    %102 = vmatpush1.bf16.msra.mxu0 0
    %103 = vmatprep.subr.bf16.mxu0 0
    %104 = vmatpush1.bf16.msra.mxu0 0
    %105 = vmatprep.subr.bf16.mxu0 0
    %106 = vmatpush1.bf16.msra.mxu0 0
    %107 = vmatprep.subr.bf16.mxu0 0
    %108 = vmatpush1.bf16.msra.mxu0 0
    %109 = vmatprep.subr.bf16.mxu0 0
    %110 = vmatpush1.bf16.msra.mxu0 0
    %111 = vmatprep.subr.bf16.mxu0 0
    %112 = vmatpush1.bf16.msra.mxu0 0
    %113 = vmatprep.subr.bf16.mxu0 0
    %114 = vmatpush1.bf16.msra.mxu0 0
    %115 = vmatprep.subr.bf16.mxu0 0
    %116 = vmatpush1.bf16.msra.mxu0 0
    %117 = vmatprep.subr.bf16.mxu0 0
    %118 = vmatpush1.bf16.msra.mxu0 0
    %119 = vmatprep.subr.bf16.mxu0 0
    %120 = vmatpush1.bf16.msra.mxu0 0
    %121 = vmatprep.mubr.bf16.mxu0 0
    %122 = vmatmul.mubr.bf16.gmra.mrb[0].mxu0 %v78
    %v123 = vpop.f32.mrb[0].mxu0
    %v124 = vadd.f32 0.0, %v123
    %v125 = vpop.f32.mrb[0].mxu0
    %v126 = vpop.f32.mrb[0].mxu0
    %v127 = vadd.f32 0.0, %v126
    %v128 = vpop.f32.mrb[0].mxu0
    %129 = vmatprep.mubr.bf16.mxu0 0
    %130 = vmatmul.mubr.bf16.gmra.mrb[0].mxu0 %v81
    %v131 = vpop.f32.mrb[0].mxu0
    %v132 = vadd.f32 0.0, %v131
    %v133 = vpop.f32.mrb[0].mxu0
    %v134 = vpop.f32.mrb[0].mxu0
    %v135 = vadd.f32 0.0, %v134
    %v136 = vpop.f32.mrb[0].mxu0
    %137 = vmatprep.mubr.bf16.mxu0 0
    %138 = vmatmul.mubr.bf16.gmra.mrb[0].mxu0 %v84
    %v139 = vpop.f32.mrb[0].mxu0
    %v140 = vadd.f32 0.0, %v139
    %v141 = vpop.f32.mrb[0].mxu0
    %v142 = vpop.f32.mrb[0].mxu0
    %v143 = vadd.f32 0.0, %v142
    %v144 = vpop.f32.mrb[0].mxu0
    %145 = vmatprep.mubr.bf16.mxu0 0
    %146 = vmatmul.mubr.bf16.gmra.mrb[0].mxu0 %v87
    %v147 = vpop.f32.mrb[0].mxu0
    %v148 = vadd.f32 0.0, %v147
    %v149 = vpop.f32.mrb[0].mxu0
    %v150 = vpop.f32.mrb[0].mxu0
    %v151 = vadd.f32 0.0, %v150
    %v152 = vpop.f32.mrb[0].mxu0
    %153 = vdwg.mxu0
    %v154 = vtanh.pop %v124
    %v155 = vtanh.pop %v127
    %v156 = vtanh.pop %v132
    %v157 = vtanh.pop %v135
    %v158 = vtanh.pop %v140
    %v159 = vtanh.pop %v143
    %v160 = vtanh.pop %v148
    %v161 = vtanh.pop %v151
    %v162 = vpack.c.bf16 %v155, %v154
    %v163 = vpack.c.bf16 %v157, %v156
    %v164 = vpack.c.bf16 %v159, %v158
    %v165 = vpack.c.bf16 %v161, %v160
    %v182 = vunpack.c.l.b16 %v28
    %v183 = vunpack.c.l.b16 %v29
    %v184 = vunpack.c.l.b16 %v30
    %v185 = vunpack.c.l.b16 %v31
    %v186 = vunpack.c.l.b16 %v32
    %v187 = vunpack.c.l.b16 %v33
    %v188 = vunpack.c.l.b16 %v34
    %v189 = vunpack.c.l.b16 %v35
    %v190 = vunpack.c.l.b16 %v36
    %v191 = vunpack.c.l.b16 %v37
    %v192 = vunpack.c.l.b16 %v38
    %v193 = vunpack.c.l.b16 %v39
    %v194 = vunpack.c.l.b16 %v40
    %v195 = vunpack.c.l.b16 %v41
    %v196 = vunpack.c.l.b16 %v42
    %v197 = vunpack.c.l.b16 %v43
    %v198 = vpack.c.b16 %v183, %v182
    %v199 = vpack.c.b16 %v185, %v184
    %v200 = vpack.c.b16 %v187, %v186
    %v201 = vpack.c.b16 %v189, %v188
    %v202 = vpack.c.b16 %v191, %v190
    %v203 = vpack.c.b16 %v193, %v192
    %v204 = vpack.c.b16 %v195, %v194
    %v205 = vpack.c.b16 %v197, %v196
    %214 = vmatprep.subr.bf16.mxu0 0
    %215 = vmatpush1.bf16.msra.mxu0 %v198
    %216 = vmatprep.subr.bf16.mxu0 0
    %217 = vmatpush1.bf16.msra.mxu0 %v199
    %218 = vmatprep.subr.bf16.mxu0 0
    %219 = vmatpush1.bf16.msra.mxu0 %v200
    %220 = vmatprep.subr.bf16.mxu0 0
    %221 = vmatpush1.bf16.msra.mxu0 %v201
    %222 = vmatprep.subr.bf16.mxu0 0
    %223 = vmatpush1.bf16.msra.mxu0 %v202
    %224 = vmatprep.subr.bf16.mxu0 0
    %225 = vmatpush1.bf16.msra.mxu0 %v203
    %226 = vmatprep.subr.bf16.mxu0 0
    %227 = vmatpush1.bf16.msra.mxu0 %v204
    %228 = vmatprep.subr.bf16.mxu0 0
    %229 = vmatpush1.bf16.msra.mxu0 %v205
    %230 = vmatprep.subr.bf16.mxu0 0
    %231 = vmatpush1.bf16.msra.mxu0 0
    %232 = vmatprep.subr.bf16.mxu0 0
    %233 = vmatpush1.bf16.msra.mxu0 0
    %234 = vmatprep.subr.bf16.mxu0 0
    %235 = vmatpush1.bf16.msra.mxu0 0
    %236 = vmatprep.subr.bf16.mxu0 0
    %237 = vmatpush1.bf16.msra.mxu0 0
    %238 = vmatprep.subr.bf16.mxu0 0
    %239 = vmatpush1.bf16.msra.mxu0 0
    %240 = vmatprep.subr.bf16.mxu0 0
    %241 = vmatpush1.bf16.msra.mxu0 0
    %242 = vmatprep.subr.bf16.mxu0 0
    %243 = vmatpush1.bf16.msra.mxu0 0
    %244 = vmatprep.subr.bf16.mxu0 0
    %245 = vmatpush1.bf16.msra.mxu0 0
    %246 = vmatprep.mubr.bf16.mxu0 0
    %247 = vmatmul.mubr.bf16.gmra.mrb[0].mxu0 %v162
    %v248 = vpop.f32.mrb[0].mxu0
    %v249 = vadd.f32 0.0, %v248
    %v250 = vpop.f32.mrb[0].mxu0
    %v251 = vpop.f32.mrb[0].mxu0
    %v252 = vadd.f32 0.0, %v251
    %v253 = vpop.f32.mrb[0].mxu0
    %254 = vmatprep.mubr.bf16.mxu0 0
    %255 = vmatmul.mubr.bf16.gmra.mrb[0].mxu0 %v163
    %v256 = vpop.f32.mrb[0].mxu0
    %v257 = vadd.f32 0.0, %v256
    %v258 = vpop.f32.mrb[0].mxu0
    %v259 = vpop.f32.mrb[0].mxu0
    %v260 = vadd.f32 0.0, %v259
    %v261 = vpop.f32.mrb[0].mxu0
    %262 = vmatprep.mubr.bf16.mxu0 0
    %263 = vmatmul.mubr.bf16.gmra.mrb[0].mxu0 %v164
    %v264 = vpop.f32.mrb[0].mxu0
    %v265 = vadd.f32 0.0, %v264
    %v266 = vpop.f32.mrb[0].mxu0
    %v267 = vpop.f32.mrb[0].mxu0
    %v268 = vadd.f32 0.0, %v267
    %v269 = vpop.f32.mrb[0].mxu0
    %270 = vmatprep.mubr.bf16.mxu0 0
    %271 = vmatmul.mubr.bf16.gmra.mrb[0].mxu0 %v165
    %v272 = vpop.f32.mrb[0].mxu0
    %v273 = vadd.f32 0.0, %v272
    %v274 = vpop.f32.mrb[0].mxu0
    %v275 = vpop.f32.mrb[0].mxu0
    %v276 = vadd.f32 0.0, %v275
    %v277 = vpop.f32.mrb[0].mxu0
    %278 = vdwg.mxu0
    %v279 = vsel %vm76, %v249, -inf
    %v280 = vrot.slane %v279, 4
    %v281 = vmax.f32 %v279, %v280
    %v282 = vrot.slane %v281, 2
    %v283 = vmax.f32 %v281, %v282
    %v284 = vrot.slane %v283, 1
    %v285 = vmax.f32 %v283, %v284
    %v286 = vsel %vm76, %v252, -inf
    %v287 = vrot.slane %v286, 4
    %v288 = vmax.f32 %v286, %v287
    %v289 = vrot.slane %v288, 2
    %v290 = vmax.f32 %v288, %v289
    %v291 = vrot.slane %v290, 1
    %v292 = vmax.f32 %v290, %v291
    %v293 = vsel %vm76, %v257, -inf
    %v294 = vrot.slane %v293, 4
    %v295 = vmax.f32 %v293, %v294
    %v296 = vrot.slane %v295, 2
    %v297 = vmax.f32 %v295, %v296
    %v298 = vrot.slane %v297, 1
    %v299 = vmax.f32 %v297, %v298
    %v300 = vsel %vm76, %v260, -inf
    %v301 = vrot.slane %v300, 4
    %v302 = vmax.f32 %v300, %v301
    %v303 = vrot.slane %v302, 2
    %v304 = vmax.f32 %v302, %v303
    %v305 = vrot.slane %v304, 1
    %v306 = vmax.f32 %v304, %v305
    %v307 = vsel %vm76, %v265, -inf
    %v308 = vrot.slane %v307, 4
    %v309 = vmax.f32 %v307, %v308
    %v310 = vrot.slane %v309, 2
    %v311 = vmax.f32 %v309, %v310
    %v312 = vrot.slane %v311, 1
    %v313 = vmax.f32 %v311, %v312
    %v314 = vsel %vm76, %v268, -inf
    %v315 = vrot.slane %v314, 4
    %v316 = vmax.f32 %v314, %v315
    %v317 = vrot.slane %v316, 2
    %v318 = vmax.f32 %v316, %v317
    %v319 = vrot.slane %v318, 1
    %v320 = vmax.f32 %v318, %v319
    %v321 = vsel %vm76, %v273, -inf
    %v322 = vrot.slane %v321, 4
    %v323 = vmax.f32 %v321, %v322
    %v324 = vrot.slane %v323, 2
    %v325 = vmax.f32 %v323, %v324
    %v326 = vrot.slane %v325, 1
    %v327 = vmax.f32 %v325, %v326
    %v328 = vsel %vm76, %v276, -inf
    %v329 = vrot.slane %v328, 4
    %v330 = vmax.f32 %v328, %v329
    %v331 = vrot.slane %v330, 2
    %v332 = vmax.f32 %v330, %v331
    %v333 = vrot.slane %v332, 1
    %v334 = vmax.f32 %v332, %v333
    %v335 = vsub.f32 %v249, %v285
    %v336 = vsub.f32 %v252, %v292
    %v337 = vsub.f32 %v257, %v299
    %v338 = vsub.f32 %v260, %v306
    %v339 = vsub.f32 %v265, %v313
    %v340 = vsub.f32 %v268, %v320
    %v341 = vsub.f32 %v273, %v327
    %v342 = vsub.f32 %v276, %v334
    %v343 = vmul.f32 %v335, 1.442695
    %v344 = vpow.pop %v343
    %v345 = vmul.f32 %v336, 1.442695
    %v346 = vpow.pop %v345
    %v347 = vmul.f32 %v337, 1.442695
    %v348 = vpow.pop %v347
    %v349 = vmul.f32 %v338, 1.442695
    %v350 = vpow.pop %v349
    %v351 = vmul.f32 %v339, 1.442695
    %v352 = vpow.pop %v351
    %v353 = vmul.f32 %v340, 1.442695
    %v354 = vpow.pop %v353
    %v355 = vmul.f32 %v341, 1.442695
    %v356 = vpow.pop %v355
    %v357 = vmul.f32 %v342, 1.442695
    %v358 = vpow.pop %v357
    %v359 = vsel %vm76, %v344, 0.0
    %v360 = vrot.slane %v359, 4
    %v361 = vadd.f32 %v359, %v360
    %v362 = vrot.slane %v361, 2
    %v363 = vadd.f32 %v361, %v362
    %v364 = vrot.slane %v363, 1
    %v365 = vadd.f32 %v363, %v364
    %v366 = vsel %vm76, %v346, 0.0
    %v367 = vrot.slane %v366, 4
    %v368 = vadd.f32 %v366, %v367
    %v369 = vrot.slane %v368, 2
    %v370 = vadd.f32 %v368, %v369
    %v371 = vrot.slane %v370, 1
    %v372 = vadd.f32 %v370, %v371
    %v373 = vsel %vm76, %v348, 0.0
    %v374 = vrot.slane %v373, 4
    %v375 = vadd.f32 %v373, %v374
    %v376 = vrot.slane %v375, 2
    %v377 = vadd.f32 %v375, %v376
    %v378 = vrot.slane %v377, 1
    %v379 = vadd.f32 %v377, %v378
    %v380 = vsel %vm76, %v350, 0.0
    %v381 = vrot.slane %v380, 4
    %v382 = vadd.f32 %v380, %v381
    %v383 = vrot.slane %v382, 2
    %v384 = vadd.f32 %v382, %v383
    %v385 = vrot.slane %v384, 1
    %v386 = vadd.f32 %v384, %v385
    %v387 = vsel %vm76, %v352, 0.0
    %v388 = vrot.slane %v387, 4
    %v389 = vadd.f32 %v387, %v388
    %v390 = vrot.slane %v389, 2
    %v391 = vadd.f32 %v389, %v390
    %v392 = vrot.slane %v391, 1
    %v393 = vadd.f32 %v391, %v392
    %v394 = vsel %vm76, %v354, 0.0
    %v395 = vrot.slane %v394, 4
    %v396 = vadd.f32 %v394, %v395
    %v397 = vrot.slane %v396, 2
    %v398 = vadd.f32 %v396, %v397
    %v399 = vrot.slane %v398, 1
    %v400 = vadd.f32 %v398, %v399
    %v401 = vsel %vm76, %v356, 0.0
    %v402 = vrot.slane %v401, 4
    %v403 = vadd.f32 %v401, %v402
    %v404 = vrot.slane %v403, 2
    %v405 = vadd.f32 %v403, %v404
    %v406 = vrot.slane %v405, 1
    %v407 = vadd.f32 %v405, %v406
    %v408 = vsel %vm76, %v358, 0.0
    %v409 = vrot.slane %v408, 4
    %v410 = vadd.f32 %v408, %v409
    %v411 = vrot.slane %v410, 2
    %v412 = vadd.f32 %v410, %v411
    %v413 = vrot.slane %v412, 1
    %v414 = vadd.f32 %v412, %v413
    %v415 = vrcp.pop %v365
    %v416 = vrcp.pop %v372
    %v417 = vrcp.pop %v379
    %v418 = vrcp.pop %v386
    %v419 = vrcp.pop %v393
    %v420 = vrcp.pop %v400
    %v421 = vrcp.pop %v407
    %v422 = vrcp.pop %v414
    %v423 = vmul.f32 %v344, %v415
    %v424 = vmul.f32 %v346, %v416
    %v425 = vmul.f32 %v348, %v417
    %v426 = vmul.f32 %v350, %v418
    %v427 = vmul.f32 %v352, %v419
    %v428 = vmul.f32 %v354, %v420
    %v429 = vmul.f32 %v356, %v421
    %v430 = vmul.f32 %v358, %v422
    %v431 = vunpack.c.l.bf16 %v16
    %v432 = vunpack.c.l.bf16 %v17
    %v433 = vunpack.c.l.bf16 %v18
    %v434 = vunpack.c.l.bf16 %v19
    %v435 = vunpack.c.l.bf16 %v20
    %v436 = vunpack.c.l.bf16 %v21
    %v437 = vunpack.c.l.bf16 %v22
    %v438 = vunpack.c.l.bf16 %v23
    %v439 = vpack.c.bf16 %v431, %v431
    %v440 = vpack.c.bf16 %v432, %v432
    %v441 = vpack.c.bf16 %v433, %v433
    %v442 = vpack.c.bf16 %v434, %v434
    %v443 = vpack.c.bf16 %v435, %v435
    %v444 = vpack.c.bf16 %v436, %v436
    %v445 = vpack.c.bf16 %v437, %v437
    %v446 = vpack.c.bf16 %v438, %v438
    %v447 = vpack.c.bf16 %v423, %v423
    %v448 = vpack.c.bf16 %v424, %v424
    %v449 = vpack.c.bf16 %v425, %v425
    %v450 = vpack.c.bf16 %v426, %v426
    %v451 = vpack.c.bf16 %v427, %v427
    %v452 = vpack.c.bf16 %v428, %v428
    %v453 = vpack.c.bf16 %v429, %v429
    %v454 = vpack.c.bf16 %v430, %v430
    %455 = vxpose.xlu0.c.b16.start [1/8] %v447, 128
    %456 = vxpose.xlu0.c.b16.cont [2/8] 0, 128
    %457 = vxpose.xlu0.c.b16.cont [3/8] 0, 128
    %458 = vxpose.xlu0.c.b16.cont [4/8] 0, 128
    %459 = vxpose.xlu0.c.b16.cont [5/8] 0, 128
    %460 = vxpose.xlu0.c.b16.cont [6/8] 0, 128
    %461 = vxpose.xlu0.c.b16.cont [7/8] 0, 128
    %462 = vxpose.xlu0.c.b16.end [8/8] 0, 128
    %v463 = vpop.trf.xlu0
    %v464 = vpop.trf.xlu0
    %v465 = vpop.trf.xlu0
    %v466 = vpop.trf.xlu0
    %v467 = vpop.trf.xlu0
    %v468 = vpop.trf.xlu0
    %v469 = vpop.trf.xlu0
    %v470 = vpop.trf.xlu0
    %vm471 = vcmask 64512
    %v473 = vsel %vm471, %v463, 0
    %v476 = vsel %vm471, %v464, 0
    %vm478 = vcmask 1043456
    %v480 = vsel %vm478, %v439, 0
    %482 = vmatprep.subr.bf16.mxu0 0
    %483 = vmatpush1.bf16.msra.mxu0 %v480
    %484 = vmatprep.subr.bf16.mxu0 0
    %485 = vmatpush1.bf16.msra.mxu0 0
    %486 = vmatprep.subr.bf16.mxu0 0
    %487 = vmatpush1.bf16.msra.mxu0 0
    %488 = vmatprep.subr.bf16.mxu0 0
    %489 = vmatpush1.bf16.msra.mxu0 0
    %490 = vmatprep.subr.bf16.mxu0 0
    %491 = vmatpush1.bf16.msra.mxu0 0
    %492 = vmatprep.subr.bf16.mxu0 0
    %493 = vmatpush1.bf16.msra.mxu0 0
    %494 = vmatprep.subr.bf16.mxu0 0
    %495 = vmatpush1.bf16.msra.mxu0 0
    %496 = vmatprep.subr.bf16.mxu0 0
    %497 = vmatpush1.bf16.msra.mxu0 0
    %498 = vmatprep.subr.bf16.mxu0 0
    %499 = vmatpush1.bf16.msra.mxu0 0
    %500 = vmatprep.subr.bf16.mxu0 0
    %501 = vmatpush1.bf16.msra.mxu0 0
    %502 = vmatprep.subr.bf16.mxu0 0
    %503 = vmatpush1.bf16.msra.mxu0 0
    %504 = vmatprep.subr.bf16.mxu0 0
    %505 = vmatpush1.bf16.msra.mxu0 0
    %506 = vmatprep.subr.bf16.mxu0 0
    %507 = vmatpush1.bf16.msra.mxu0 0
    %508 = vmatprep.subr.bf16.mxu0 0
    %509 = vmatpush1.bf16.msra.mxu0 0
    %510 = vmatprep.subr.bf16.mxu0 0
    %511 = vmatpush1.bf16.msra.mxu0 0
    %512 = vmatprep.subr.bf16.mxu0 0
    %513 = vmatpush1.bf16.msra.mxu0 0
    %514 = vmatprep.mubr.bf16.mxu0 0
    %515 = vmatmul.mubr.bf16.gmra.mrb[0].mxu0 %v473
    %v516 = vpop.f32.mrb[0].mxu0
    %v517 = vadd.f32 0.0, %v516
    %v518 = vpop.f32.mrb[0].mxu0
    %v519 = vpop.f32.mrb[0].mxu0
    %v520 = vadd.f32 0.0, %v519
    %v521 = vpop.f32.mrb[0].mxu0
    %522 = vmatprep.mubr.bf16.mxu0 0
    %523 = vmatmul.mubr.bf16.gmra.mrb[0].mxu0 %v476
    %v524 = vpop.f32.mrb[0].mxu0
    %v525 = vadd.f32 0.0, %v524
    %v526 = vpop.f32.mrb[0].mxu0
    %v527 = vpop.f32.mrb[0].mxu0
    %v528 = vadd.f32 0.0, %v527
    %v529 = vpop.f32.mrb[0].mxu0
    %530 = vdwg.mxu0
    %531 = vxpose.xlu0.c.b16.start [1/8] %v448, 128
    %532 = vxpose.xlu0.c.b16.cont [2/8] 0, 128
    %533 = vxpose.xlu0.c.b16.cont [3/8] 0, 128
    %534 = vxpose.xlu0.c.b16.cont [4/8] 0, 128
    %535 = vxpose.xlu0.c.b16.cont [5/8] 0, 128
    %536 = vxpose.xlu0.c.b16.cont [6/8] 0, 128
    %537 = vxpose.xlu0.c.b16.cont [7/8] 0, 128
    %538 = vxpose.xlu0.c.b16.end [8/8] 0, 128
    %v539 = vpop.trf.xlu0
    %v540 = vpop.trf.xlu0
    %v541 = vpop.trf.xlu0
    %v542 = vpop.trf.xlu0
    %v543 = vpop.trf.xlu0
    %v544 = vpop.trf.xlu0
    %v545 = vpop.trf.xlu0
    %v546 = vpop.trf.xlu0
    %v548 = vsel %vm471, %v539, 0
    %v551 = vsel %vm471, %v540, 0
    %v554 = vsel %vm478, %v440, 0
    %556 = vmatprep.subr.bf16.mxu0 0
    %557 = vmatpush1.bf16.msra.mxu0 %v554
    %558 = vmatprep.subr.bf16.mxu0 0
    %559 = vmatpush1.bf16.msra.mxu0 0
    %560 = vmatprep.subr.bf16.mxu0 0
    %561 = vmatpush1.bf16.msra.mxu0 0
    %562 = vmatprep.subr.bf16.mxu0 0
    %563 = vmatpush1.bf16.msra.mxu0 0
    %564 = vmatprep.subr.bf16.mxu0 0
    %565 = vmatpush1.bf16.msra.mxu0 0
    %566 = vmatprep.subr.bf16.mxu0 0
    %567 = vmatpush1.bf16.msra.mxu0 0
    %568 = vmatprep.subr.bf16.mxu0 0
    %569 = vmatpush1.bf16.msra.mxu0 0
    %570 = vmatprep.subr.bf16.mxu0 0
    %571 = vmatpush1.bf16.msra.mxu0 0
    %572 = vmatprep.subr.bf16.mxu0 0
    %573 = vmatpush1.bf16.msra.mxu0 0
    %574 = vmatprep.subr.bf16.mxu0 0
    %575 = vmatpush1.bf16.msra.mxu0 0
    %576 = vmatprep.subr.bf16.mxu0 0
    %577 = vmatpush1.bf16.msra.mxu0 0
    %578 = vmatprep.subr.bf16.mxu0 0
    %579 = vmatpush1.bf16.msra.mxu0 0
    %580 = vmatprep.subr.bf16.mxu0 0
    %581 = vmatpush1.bf16.msra.mxu0 0
    %582 = vmatprep.subr.bf16.mxu0 0
    %583 = vmatpush1.bf16.msra.mxu0 0
    %584 = vmatprep.subr.bf16.mxu0 0
    %585 = vmatpush1.bf16.msra.mxu0 0
    %586 = vmatprep.subr.bf16.mxu0 0
    %587 = vmatpush1.bf16.msra.mxu0 0
    %588 = vmatprep.mubr.bf16.mxu0 0
    %589 = vmatmul.mubr.bf16.gmra.mrb[0].mxu0 %v548
    %v590 = vpop.f32.mrb[0].mxu0
    %v591 = vadd.f32 0.0, %v590
    %v592 = vpop.f32.mrb[0].mxu0
    %v593 = vpop.f32.mrb[0].mxu0
    %v594 = vadd.f32 0.0, %v593
    %v595 = vpop.f32.mrb[0].mxu0
    %596 = vmatprep.mubr.bf16.mxu0 0
    %597 = vmatmul.mubr.bf16.gmra.mrb[0].mxu0 %v551
    %v598 = vpop.f32.mrb[0].mxu0
    %v599 = vadd.f32 0.0, %v598
    %v600 = vpop.f32.mrb[0].mxu0
    %v601 = vpop.f32.mrb[0].mxu0
    %v602 = vadd.f32 0.0, %v601
    %v603 = vpop.f32.mrb[0].mxu0
    %604 = vdwg.mxu0
    %605 = vxpose.xlu0.c.b16.start [1/8] %v449, 128
    %606 = vxpose.xlu0.c.b16.cont [2/8] 0, 128
    %607 = vxpose.xlu0.c.b16.cont [3/8] 0, 128
    %608 = vxpose.xlu0.c.b16.cont [4/8] 0, 128
    %609 = vxpose.xlu0.c.b16.cont [5/8] 0, 128
    %610 = vxpose.xlu0.c.b16.cont [6/8] 0, 128
    %611 = vxpose.xlu0.c.b16.cont [7/8] 0, 128
    %612 = vxpose.xlu0.c.b16.end [8/8] 0, 128
    %v613 = vpop.trf.xlu0
    %v614 = vpop.trf.xlu0
    %v615 = vpop.trf.xlu0
    %v616 = vpop.trf.xlu0
    %v617 = vpop.trf.xlu0
    %v618 = vpop.trf.xlu0
    %v619 = vpop.trf.xlu0
    %v620 = vpop.trf.xlu0
    %v622 = vsel %vm471, %v613, 0
    %v625 = vsel %vm471, %v614, 0
    %v628 = vsel %vm478, %v441, 0
    %630 = vmatprep.subr.bf16.mxu0 0
    %631 = vmatpush1.bf16.msra.mxu0 %v628
    %632 = vmatprep.subr.bf16.mxu0 0
    %633 = vmatpush1.bf16.msra.mxu0 0
    %634 = vmatprep.subr.bf16.mxu0 0
    %635 = vmatpush1.bf16.msra.mxu0 0
    %636 = vmatprep.subr.bf16.mxu0 0
    %637 = vmatpush1.bf16.msra.mxu0 0
    %638 = vmatprep.subr.bf16.mxu0 0
    %639 = vmatpush1.bf16.msra.mxu0 0
    %640 = vmatprep.subr.bf16.mxu0 0
    %641 = vmatpush1.bf16.msra.mxu0 0
    %642 = vmatprep.subr.bf16.mxu0 0
    %643 = vmatpush1.bf16.msra.mxu0 0
    %644 = vmatprep.subr.bf16.mxu0 0
    %645 = vmatpush1.bf16.msra.mxu0 0
    %646 = vmatprep.subr.bf16.mxu0 0
    %647 = vmatpush1.bf16.msra.mxu0 0
    %648 = vmatprep.subr.bf16.mxu0 0
    %649 = vmatpush1.bf16.msra.mxu0 0
    %650 = vmatprep.subr.bf16.mxu0 0
    %651 = vmatpush1.bf16.msra.mxu0 0
    %652 = vmatprep.subr.bf16.mxu0 0
    %653 = vmatpush1.bf16.msra.mxu0 0
    %654 = vmatprep.subr.bf16.mxu0 0
    %655 = vmatpush1.bf16.msra.mxu0 0
    %656 = vmatprep.subr.bf16.mxu0 0
    %657 = vmatpush1.bf16.msra.mxu0 0
    %658 = vmatprep.subr.bf16.mxu0 0
    %659 = vmatpush1.bf16.msra.mxu0 0
    %660 = vmatprep.subr.bf16.mxu0 0
    %661 = vmatpush1.bf16.msra.mxu0 0
    %662 = vmatprep.mubr.bf16.mxu0 0
    %663 = vmatmul.mubr.bf16.gmra.mrb[0].mxu0 %v622
    %v664 = vpop.f32.mrb[0].mxu0
    %v665 = vadd.f32 0.0, %v664
    %v666 = vpop.f32.mrb[0].mxu0
    %v667 = vpop.f32.mrb[0].mxu0
    %v668 = vadd.f32 0.0, %v667
    %v669 = vpop.f32.mrb[0].mxu0
    %670 = vmatprep.mubr.bf16.mxu0 0
    %671 = vmatmul.mubr.bf16.gmra.mrb[0].mxu0 %v625
    %v672 = vpop.f32.mrb[0].mxu0
    %v673 = vadd.f32 0.0, %v672
    %v674 = vpop.f32.mrb[0].mxu0
    %v675 = vpop.f32.mrb[0].mxu0
    %v676 = vadd.f32 0.0, %v675
    %v677 = vpop.f32.mrb[0].mxu0
    %678 = vdwg.mxu0
    %679 = vxpose.xlu0.c.b16.start [1/8] %v450, 128
    %680 = vxpose.xlu0.c.b16.cont [2/8] 0, 128
    %681 = vxpose.xlu0.c.b16.cont [3/8] 0, 128
    %682 = vxpose.xlu0.c.b16.cont [4/8] 0, 128
    %683 = vxpose.xlu0.c.b16.cont [5/8] 0, 128
    %684 = vxpose.xlu0.c.b16.cont [6/8] 0, 128
    %685 = vxpose.xlu0.c.b16.cont [7/8] 0, 128
    %686 = vxpose.xlu0.c.b16.end [8/8] 0, 128
    %v687 = vpop.trf.xlu0
    %v688 = vpop.trf.xlu0
    %v689 = vpop.trf.xlu0
    %v690 = vpop.trf.xlu0
    %v691 = vpop.trf.xlu0
    %v692 = vpop.trf.xlu0
    %v693 = vpop.trf.xlu0
    %v694 = vpop.trf.xlu0
    %v696 = vsel %vm471, %v687, 0
    %v699 = vsel %vm471, %v688, 0
    %v702 = vsel %vm478, %v442, 0
    %704 = vmatprep.subr.bf16.mxu0 0
    %705 = vmatpush1.bf16.msra.mxu0 %v702
    %706 = vmatprep.subr.bf16.mxu0 0
    %707 = vmatpush1.bf16.msra.mxu0 0
    %708 = vmatprep.subr.bf16.mxu0 0
    %709 = vmatpush1.bf16.msra.mxu0 0
    %710 = vmatprep.subr.bf16.mxu0 0
    %711 = vmatpush1.bf16.msra.mxu0 0
    %712 = vmatprep.subr.bf16.mxu0 0
    %713 = vmatpush1.bf16.msra.mxu0 0
    %714 = vmatprep.subr.bf16.mxu0 0
    %715 = vmatpush1.bf16.msra.mxu0 0
    %716 = vmatprep.subr.bf16.mxu0 0
    %717 = vmatpush1.bf16.msra.mxu0 0
    %718 = vmatprep.subr.bf16.mxu0 0
    %719 = vmatpush1.bf16.msra.mxu0 0
    %720 = vmatprep.subr.bf16.mxu0 0
    %721 = vmatpush1.bf16.msra.mxu0 0
    %722 = vmatprep.subr.bf16.mxu0 0
    %723 = vmatpush1.bf16.msra.mxu0 0
    %724 = vmatprep.subr.bf16.mxu0 0
    %725 = vmatpush1.bf16.msra.mxu0 0
    %726 = vmatprep.subr.bf16.mxu0 0
    %727 = vmatpush1.bf16.msra.mxu0 0
    %728 = vmatprep.subr.bf16.mxu0 0
    %729 = vmatpush1.bf16.msra.mxu0 0
    %730 = vmatprep.subr.bf16.mxu0 0
    %731 = vmatpush1.bf16.msra.mxu0 0
    %732 = vmatprep.subr.bf16.mxu0 0
    %733 = vmatpush1.bf16.msra.mxu0 0
    %734 = vmatprep.subr.bf16.mxu0 0
    %735 = vmatpush1.bf16.msra.mxu0 0
    %736 = vmatprep.mubr.bf16.mxu0 0
    %737 = vmatmul.mubr.bf16.gmra.mrb[0].mxu0 %v696
    %v738 = vpop.f32.mrb[0].mxu0
    %v739 = vadd.f32 0.0, %v738
    %v740 = vpop.f32.mrb[0].mxu0
    %v741 = vpop.f32.mrb[0].mxu0
    %v742 = vadd.f32 0.0, %v741
    %v743 = vpop.f32.mrb[0].mxu0
    %744 = vmatprep.mubr.bf16.mxu0 0
    %745 = vmatmul.mubr.bf16.gmra.mrb[0].mxu0 %v699
    %v746 = vpop.f32.mrb[0].mxu0
    %v747 = vadd.f32 0.0, %v746
    %v748 = vpop.f32.mrb[0].mxu0
    %v749 = vpop.f32.mrb[0].mxu0
    %v750 = vadd.f32 0.0, %v749
    %v751 = vpop.f32.mrb[0].mxu0
    %752 = vdwg.mxu0
    %753 = vxpose.xlu0.c.b16.start [1/8] %v451, 128
    %754 = vxpose.xlu0.c.b16.cont [2/8] 0, 128
    %755 = vxpose.xlu0.c.b16.cont [3/8] 0, 128
    %756 = vxpose.xlu0.c.b16.cont [4/8] 0, 128
    %757 = vxpose.xlu0.c.b16.cont [5/8] 0, 128
    %758 = vxpose.xlu0.c.b16.cont [6/8] 0, 128
    %759 = vxpose.xlu0.c.b16.cont [7/8] 0, 128
    %760 = vxpose.xlu0.c.b16.end [8/8] 0, 128
    %v761 = vpop.trf.xlu0
    %v762 = vpop.trf.xlu0
    %v763 = vpop.trf.xlu0
    %v764 = vpop.trf.xlu0
    %v765 = vpop.trf.xlu0
    %v766 = vpop.trf.xlu0
    %v767 = vpop.trf.xlu0
    %v768 = vpop.trf.xlu0
    %v770 = vsel %vm471, %v761, 0
    %v773 = vsel %vm471, %v762, 0
    %v776 = vsel %vm478, %v443, 0
    %778 = vmatprep.subr.bf16.mxu0 0
    %779 = vmatpush1.bf16.msra.mxu0 %v776
    %780 = vmatprep.subr.bf16.mxu0 0
    %781 = vmatpush1.bf16.msra.mxu0 0
    %782 = vmatprep.subr.bf16.mxu0 0
    %783 = vmatpush1.bf16.msra.mxu0 0
    %784 = vmatprep.subr.bf16.mxu0 0
    %785 = vmatpush1.bf16.msra.mxu0 0
    %786 = vmatprep.subr.bf16.mxu0 0
    %787 = vmatpush1.bf16.msra.mxu0 0
    %788 = vmatprep.subr.bf16.mxu0 0
    %789 = vmatpush1.bf16.msra.mxu0 0
    %790 = vmatprep.subr.bf16.mxu0 0
    %791 = vmatpush1.bf16.msra.mxu0 0
    %792 = vmatprep.subr.bf16.mxu0 0
    %793 = vmatpush1.bf16.msra.mxu0 0
    %794 = vmatprep.subr.bf16.mxu0 0
    %795 = vmatpush1.bf16.msra.mxu0 0
    %796 = vmatprep.subr.bf16.mxu0 0
    %797 = vmatpush1.bf16.msra.mxu0 0
    %798 = vmatprep.subr.bf16.mxu0 0
    %799 = vmatpush1.bf16.msra.mxu0 0
    %800 = vmatprep.subr.bf16.mxu0 0
    %801 = vmatpush1.bf16.msra.mxu0 0
    %802 = vmatprep.subr.bf16.mxu0 0
    %803 = vmatpush1.bf16.msra.mxu0 0
    %804 = vmatprep.subr.bf16.mxu0 0
    %805 = vmatpush1.bf16.msra.mxu0 0
    %806 = vmatprep.subr.bf16.mxu0 0
    %807 = vmatpush1.bf16.msra.mxu0 0
    %808 = vmatprep.subr.bf16.mxu0 0
    %809 = vmatpush1.bf16.msra.mxu0 0
    %810 = vmatprep.mubr.bf16.mxu0 0
    %811 = vmatmul.mubr.bf16.gmra.mrb[0].mxu0 %v770
    %v812 = vpop.f32.mrb[0].mxu0
    %v813 = vadd.f32 0.0, %v812
    %v814 = vpop.f32.mrb[0].mxu0
    %v815 = vpop.f32.mrb[0].mxu0
    %v816 = vadd.f32 0.0, %v815
    %v817 = vpop.f32.mrb[0].mxu0
    %818 = vmatprep.mubr.bf16.mxu0 0
    %819 = vmatmul.mubr.bf16.gmra.mrb[0].mxu0 %v773
    %v820 = vpop.f32.mrb[0].mxu0
    %v821 = vadd.f32 0.0, %v820
    %v822 = vpop.f32.mrb[0].mxu0
    %v823 = vpop.f32.mrb[0].mxu0
    %v824 = vadd.f32 0.0, %v823
    %v825 = vpop.f32.mrb[0].mxu0
    %826 = vdwg.mxu0
    %827 = vxpose.xlu0.c.b16.start [1/8] %v452, 128
    %828 = vxpose.xlu0.c.b16.cont [2/8] 0, 128
    %829 = vxpose.xlu0.c.b16.cont [3/8] 0, 128
    %830 = vxpose.xlu0.c.b16.cont [4/8] 0, 128
    %831 = vxpose.xlu0.c.b16.cont [5/8] 0, 128
    %832 = vxpose.xlu0.c.b16.cont [6/8] 0, 128
    %833 = vxpose.xlu0.c.b16.cont [7/8] 0, 128
    %834 = vxpose.xlu0.c.b16.end [8/8] 0, 128
    %v835 = vpop.trf.xlu0
    %v836 = vpop.trf.xlu0
    %v837 = vpop.trf.xlu0
    %v838 = vpop.trf.xlu0
    %v839 = vpop.trf.xlu0
    %v840 = vpop.trf.xlu0
    %v841 = vpop.trf.xlu0
    %v842 = vpop.trf.xlu0
    %v844 = vsel %vm471, %v835, 0
    %v847 = vsel %vm471, %v836, 0
    %v850 = vsel %vm478, %v444, 0
    %852 = vmatprep.subr.bf16.mxu0 0
    %853 = vmatpush1.bf16.msra.mxu0 %v850
    %854 = vmatprep.subr.bf16.mxu0 0
    %855 = vmatpush1.bf16.msra.mxu0 0
    %856 = vmatprep.subr.bf16.mxu0 0
    %857 = vmatpush1.bf16.msra.mxu0 0
    %858 = vmatprep.subr.bf16.mxu0 0
    %859 = vmatpush1.bf16.msra.mxu0 0
    %860 = vmatprep.subr.bf16.mxu0 0
    %861 = vmatpush1.bf16.msra.mxu0 0
    %862 = vmatprep.subr.bf16.mxu0 0
    %863 = vmatpush1.bf16.msra.mxu0 0
    %864 = vmatprep.subr.bf16.mxu0 0
    %865 = vmatpush1.bf16.msra.mxu0 0
    %866 = vmatprep.subr.bf16.mxu0 0
    %867 = vmatpush1.bf16.msra.mxu0 0
    %868 = vmatprep.subr.bf16.mxu0 0
    %869 = vmatpush1.bf16.msra.mxu0 0
    %870 = vmatprep.subr.bf16.mxu0 0
    %871 = vmatpush1.bf16.msra.mxu0 0
    %872 = vmatprep.subr.bf16.mxu0 0
    %873 = vmatpush1.bf16.msra.mxu0 0
    %874 = vmatprep.subr.bf16.mxu0 0
    %875 = vmatpush1.bf16.msra.mxu0 0
    %876 = vmatprep.subr.bf16.mxu0 0
    %877 = vmatpush1.bf16.msra.mxu0 0
    %878 = vmatprep.subr.bf16.mxu0 0
    %879 = vmatpush1.bf16.msra.mxu0 0
    %880 = vmatprep.subr.bf16.mxu0 0
    %881 = vmatpush1.bf16.msra.mxu0 0
    %882 = vmatprep.subr.bf16.mxu0 0
    %883 = vmatpush1.bf16.msra.mxu0 0
    %884 = vmatprep.mubr.bf16.mxu0 0
    %885 = vmatmul.mubr.bf16.gmra.mrb[0].mxu0 %v844
    %v886 = vpop.f32.mrb[0].mxu0
    %v887 = vadd.f32 0.0, %v886
    %v888 = vpop.f32.mrb[0].mxu0
    %v889 = vpop.f32.mrb[0].mxu0
    %v890 = vadd.f32 0.0, %v889
    %v891 = vpop.f32.mrb[0].mxu0
    %892 = vmatprep.mubr.bf16.mxu0 0
    %893 = vmatmul.mubr.bf16.gmra.mrb[0].mxu0 %v847
    %v894 = vpop.f32.mrb[0].mxu0
    %v895 = vadd.f32 0.0, %v894
    %v896 = vpop.f32.mrb[0].mxu0
    %v897 = vpop.f32.mrb[0].mxu0
    %v898 = vadd.f32 0.0, %v897
    %v899 = vpop.f32.mrb[0].mxu0
    %900 = vdwg.mxu0
    %901 = vxpose.xlu0.c.b16.start [1/8] %v453, 128
    %902 = vxpose.xlu0.c.b16.cont [2/8] 0, 128
    %903 = vxpose.xlu0.c.b16.cont [3/8] 0, 128
    %904 = vxpose.xlu0.c.b16.cont [4/8] 0, 128
    %905 = vxpose.xlu0.c.b16.cont [5/8] 0, 128
    %906 = vxpose.xlu0.c.b16.cont [6/8] 0, 128
    %907 = vxpose.xlu0.c.b16.cont [7/8] 0, 128
    %908 = vxpose.xlu0.c.b16.end [8/8] 0, 128
    %v909 = vpop.trf.xlu0
    %v910 = vpop.trf.xlu0
    %v911 = vpop.trf.xlu0
    %v912 = vpop.trf.xlu0
    %v913 = vpop.trf.xlu0
    %v914 = vpop.trf.xlu0
    %v915 = vpop.trf.xlu0
    %v916 = vpop.trf.xlu0
    %v918 = vsel %vm471, %v909, 0
    %v921 = vsel %vm471, %v910, 0
    %v924 = vsel %vm478, %v445, 0
    %926 = vmatprep.subr.bf16.mxu0 0
    %927 = vmatpush1.bf16.msra.mxu0 %v924
    %928 = vmatprep.subr.bf16.mxu0 0
    %929 = vmatpush1.bf16.msra.mxu0 0
    %930 = vmatprep.subr.bf16.mxu0 0
    %931 = vmatpush1.bf16.msra.mxu0 0
    %932 = vmatprep.subr.bf16.mxu0 0
    %933 = vmatpush1.bf16.msra.mxu0 0
    %934 = vmatprep.subr.bf16.mxu0 0
    %935 = vmatpush1.bf16.msra.mxu0 0
    %936 = vmatprep.subr.bf16.mxu0 0
    %937 = vmatpush1.bf16.msra.mxu0 0
    %938 = vmatprep.subr.bf16.mxu0 0
    %939 = vmatpush1.bf16.msra.mxu0 0
    %940 = vmatprep.subr.bf16.mxu0 0
    %941 = vmatpush1.bf16.msra.mxu0 0
    %942 = vmatprep.subr.bf16.mxu0 0
    %943 = vmatpush1.bf16.msra.mxu0 0
    %944 = vmatprep.subr.bf16.mxu0 0
    %945 = vmatpush1.bf16.msra.mxu0 0
    %946 = vmatprep.subr.bf16.mxu0 0
    %947 = vmatpush1.bf16.msra.mxu0 0
    %948 = vmatprep.subr.bf16.mxu0 0
    %949 = vmatpush1.bf16.msra.mxu0 0
    %950 = vmatprep.subr.bf16.mxu0 0
    %951 = vmatpush1.bf16.msra.mxu0 0
    %952 = vmatprep.subr.bf16.mxu0 0
    %953 = vmatpush1.bf16.msra.mxu0 0
    %954 = vmatprep.subr.bf16.mxu0 0
    %955 = vmatpush1.bf16.msra.mxu0 0
    %956 = vmatprep.subr.bf16.mxu0 0
    %957 = vmatpush1.bf16.msra.mxu0 0
    %958 = vmatprep.mubr.bf16.mxu0 0
    %959 = vmatmul.mubr.bf16.gmra.mrb[0].mxu0 %v918
    %v960 = vpop.f32.mrb[0].mxu0
    %v961 = vadd.f32 0.0, %v960
    %v962 = vpop.f32.mrb[0].mxu0
    %v963 = vpop.f32.mrb[0].mxu0
    %v964 = vadd.f32 0.0, %v963
    %v965 = vpop.f32.mrb[0].mxu0
    %966 = vmatprep.mubr.bf16.mxu0 0
    %967 = vmatmul.mubr.bf16.gmra.mrb[0].mxu0 %v921
    %v968 = vpop.f32.mrb[0].mxu0
    %v969 = vadd.f32 0.0, %v968
    %v970 = vpop.f32.mrb[0].mxu0
    %v971 = vpop.f32.mrb[0].mxu0
    %v972 = vadd.f32 0.0, %v971
    %v973 = vpop.f32.mrb[0].mxu0
    %974 = vdwg.mxu0
    %975 = vxpose.xlu0.c.b16.start [1/8] %v454, 128
    %976 = vxpose.xlu0.c.b16.cont [2/8] 0, 128
    %977 = vxpose.xlu0.c.b16.cont [3/8] 0, 128
    %978 = vxpose.xlu0.c.b16.cont [4/8] 0, 128
    %979 = vxpose.xlu0.c.b16.cont [5/8] 0, 128
    %980 = vxpose.xlu0.c.b16.cont [6/8] 0, 128
    %981 = vxpose.xlu0.c.b16.cont [7/8] 0, 128
    %982 = vxpose.xlu0.c.b16.end [8/8] 0, 128
    %v983 = vpop.trf.xlu0
    %v984 = vpop.trf.xlu0
    %v985 = vpop.trf.xlu0
    %v986 = vpop.trf.xlu0
    %v987 = vpop.trf.xlu0
    %v988 = vpop.trf.xlu0
    %v989 = vpop.trf.xlu0
    %v990 = vpop.trf.xlu0
    %v992 = vsel %vm471, %v983, 0
    %v995 = vsel %vm471, %v984, 0
    %v998 = vsel %vm478, %v446, 0
    %1000 = vmatprep.subr.bf16.mxu0 0
    %1001 = vmatpush1.bf16.msra.mxu0 %v998
    %1002 = vmatprep.subr.bf16.mxu0 0
    %1003 = vmatpush1.bf16.msra.mxu0 0
    %1004 = vmatprep.subr.bf16.mxu0 0
    %1005 = vmatpush1.bf16.msra.mxu0 0
    %1006 = vmatprep.subr.bf16.mxu0 0
    %1007 = vmatpush1.bf16.msra.mxu0 0
    %1008 = vmatprep.subr.bf16.mxu0 0
    %1009 = vmatpush1.bf16.msra.mxu0 0
    %1010 = vmatprep.subr.bf16.mxu0 0
    %1011 = vmatpush1.bf16.msra.mxu0 0
    %1012 = vmatprep.subr.bf16.mxu0 0
    %1013 = vmatpush1.bf16.msra.mxu0 0
    %1014 = vmatprep.subr.bf16.mxu0 0
    %1015 = vmatpush1.bf16.msra.mxu0 0
    %1016 = vmatprep.subr.bf16.mxu0 0
    %1017 = vmatpush1.bf16.msra.mxu0 0
    %1018 = vmatprep.subr.bf16.mxu0 0
    %1019 = vmatpush1.bf16.msra.mxu0 0
    %1020 = vmatprep.subr.bf16.mxu0 0
    %1021 = vmatpush1.bf16.msra.mxu0 0
    %1022 = vmatprep.subr.bf16.mxu0 0
    %1023 = vmatpush1.bf16.msra.mxu0 0
    %1024 = vmatprep.subr.bf16.mxu0 0
    %1025 = vmatpush1.bf16.msra.mxu0 0
    %1026 = vmatprep.subr.bf16.mxu0 0
    %1027 = vmatpush1.bf16.msra.mxu0 0
    %1028 = vmatprep.subr.bf16.mxu0 0
    %1029 = vmatpush1.bf16.msra.mxu0 0
    %1030 = vmatprep.subr.bf16.mxu0 0
    %1031 = vmatpush1.bf16.msra.mxu0 0
    %1032 = vmatprep.mubr.bf16.mxu0 0
    %1033 = vmatmul.mubr.bf16.gmra.mrb[0].mxu0 %v992
    %v1034 = vpop.f32.mrb[0].mxu0
    %v1035 = vadd.f32 0.0, %v1034
    %v1036 = vpop.f32.mrb[0].mxu0
    %v1037 = vpop.f32.mrb[0].mxu0
    %v1038 = vadd.f32 0.0, %v1037
    %v1039 = vpop.f32.mrb[0].mxu0
    %1040 = vmatprep.mubr.bf16.mxu0 0
    %1041 = vmatmul.mubr.bf16.gmra.mrb[0].mxu0 %v995
    %v1042 = vpop.f32.mrb[0].mxu0
    %v1043 = vadd.f32 0.0, %v1042
    %v1044 = vpop.f32.mrb[0].mxu0
    %v1045 = vpop.f32.mrb[0].mxu0
    %v1046 = vadd.f32 0.0, %v1045
    %v1047 = vpop.f32.mrb[0].mxu0
    %1048 = vdwg.mxu0
    %v1057 = vrot.slane %v591, 7
    %vm1058 = vcmask 1041409
    %v1059 = vsel %vm1058, %v1057, %v517
    %v1060 = vrot.slane %v665, 6
    %vm1061 = vcmask 1042434
    %v1062 = vsel %vm1061, %v1060, %v1059
    %v1063 = vrot.slane %v739, 5
    %vm1064 = vcmask 1043459
    %v1065 = vsel %vm1064, %v1063, %v1062
    %v1066 = vrot.slane %v813, 4
    %vm1067 = vcmask 1044484
    %v1068 = vsel %vm1067, %v1066, %v1065
    %v1069 = vrot.slane %v887, 3
    %vm1070 = vcmask 1045509
    %v1071 = vsel %vm1070, %v1069, %v1068
    %v1072 = vrot.slane %v961, 2
    %vm1073 = vcmask 1046534
    %v1074 = vsel %vm1073, %v1072, %v1071
    %v1075 = vrot.slane %v1035, 1
    %vm1076 = vcmask 1047559
    %v1077 = vsel %vm1076, %v1075, %v1074
    %1079 = vst.msk [vmem:[#allocation2] sm:$0xff] %vm76, %v1077
    %v1080 = vrot.slane %v517, 1
    %v1081 = vsel %vm1058, %v591, %v1080
    %v1082 = vrot.slane %v665, 7
    %v1083 = vsel %vm1061, %v1082, %v1081
    %v1084 = vrot.slane %v739, 6
    %v1085 = vsel %vm1064, %v1084, %v1083
    %v1086 = vrot.slane %v813, 5
    %v1087 = vsel %vm1067, %v1086, %v1085
    %v1088 = vrot.slane %v887, 4
    %v1089 = vsel %vm1070, %v1088, %v1087
    %v1090 = vrot.slane %v961, 3
    %v1091 = vsel %vm1073, %v1090, %v1089
    %v1092 = vrot.slane %v1035, 2
    %v1093 = vsel %vm1076, %v1092, %v1091
    %1094 = vrot.lane.b32.xlu0 %v1093, 32
    %v1095 = vpop.permute.xlu0 %1094
    %vm1097 = vcmask 523520
    %1098 = vst.msk [vmem:[#allocation2] sm:$0xff] %vm1097, %v1095
    %v1099 = vrot.slane %v517, 2
    %v1100 = vrot.slane %v591, 1
    %v1101 = vsel %vm1058, %v1100, %v1099
    %v1102 = vsel %vm1061, %v665, %v1101
    %v1103 = vrot.slane %v739, 7
    %v1104 = vsel %vm1064, %v1103, %v1102
    %v1105 = vrot.slane %v813, 6
    %v1106 = vsel %vm1067, %v1105, %v1104
    %v1107 = vrot.slane %v887, 5
    %v1108 = vsel %vm1070, %v1107, %v1106
    %v1109 = vrot.slane %v961, 4
    %v1110 = vsel %vm1073, %v1109, %v1108
    %v1111 = vrot.slane %v1035, 3
    %v1112 = vsel %vm1076, %v1111, %v1110
    %1113 = vrot.lane.b32.xlu0 %v1112, 64
    %v1114 = vpop.permute.xlu0 %1113
    %vm1116 = vcmask 785920
    %1117 = vst.msk [vmem:[#allocation2] sm:$0xff] %vm1116, %v1114
    %v1118 = vrot.slane %v517, 3
    %v1119 = vrot.slane %v591, 2
    %v1120 = vsel %vm1058, %v1119, %v1118
    %v1121 = vrot.slane %v665, 1
    %v1122 = vsel %vm1061, %v1121, %v1120
    %v1123 = vsel %vm1064, %v739, %v1122
    %v1124 = vrot.slane %v813, 7
    %v1125 = vsel %vm1067, %v1124, %v1123
    %v1126 = vrot.slane %v887, 6
    %v1127 = vsel %vm1070, %v1126, %v1125
    %v1128 = vrot.slane %v961, 5
    %v1129 = vsel %vm1073, %v1128, %v1127
    %v1130 = vrot.slane %v1035, 4
    %v1131 = vsel %vm1076, %v1130, %v1129
    %1132 = vrot.lane.b32.xlu0 %v1131, 96
    %v1133 = vpop.permute.xlu0 %1132
    %vm1135 = vcmask 1048320
    %1136 = vst.msk [vmem:[#allocation2] sm:$0xff] %vm1135, %v1133
    %v1137 = vrot.slane %v517, 4
    %v1138 = vrot.slane %v591, 3
    %v1139 = vsel %vm1058, %v1138, %v1137
    %v1140 = vrot.slane %v665, 2
    %v1141 = vsel %vm1061, %v1140, %v1139
    %v1142 = vrot.slane %v739, 1
    %v1143 = vsel %vm1064, %v1142, %v1141
    %v1144 = vsel %vm1067, %v813, %v1143
    %v1145 = vrot.slane %v887, 7
    %v1146 = vsel %vm1070, %v1145, %v1144
    %v1147 = vrot.slane %v961, 6
    %v1148 = vsel %vm1073, %v1147, %v1146
    %v1149 = vrot.slane %v1035, 5
    %v1150 = vsel %vm1076, %v1149, %v1148
    %1152 = vst.msk [vmem:[#allocation2 + $0x8] sm:$0xff] %vm76, %v1150
    %v1153 = vrot.slane %v517, 5
    %v1154 = vrot.slane %v591, 4
    %v1155 = vsel %vm1058, %v1154, %v1153
    %v1156 = vrot.slane %v665, 3
    %v1157 = vsel %vm1061, %v1156, %v1155
    %v1158 = vrot.slane %v739, 2
    %v1159 = vsel %vm1064, %v1158, %v1157
    %v1160 = vrot.slane %v813, 1
    %v1161 = vsel %vm1067, %v1160, %v1159
    %v1162 = vsel %vm1070, %v887, %v1161
    %v1163 = vrot.slane %v961, 7
    %v1164 = vsel %vm1073, %v1163, %v1162
    %v1165 = vrot.slane %v1035, 6
    %v1166 = vsel %vm1076, %v1165, %v1164
    %1167 = vrot.lane.b32.xlu0 %v1166, 32
    %v1168 = vpop.permute.xlu0 %1167
    %1170 = vst.msk [vmem:[#allocation2 + $0x8] sm:$0xff] %vm1097, %v1168
    %v1171 = vrot.slane %v517, 6
    %v1172 = vrot.slane %v591, 5
    %v1173 = vsel %vm1058, %v1172, %v1171
    %v1174 = vrot.slane %v665, 4
    %v1175 = vsel %vm1061, %v1174, %v1173
    %v1176 = vrot.slane %v739, 3
    %v1177 = vsel %vm1064, %v1176, %v1175
    %v1178 = vrot.slane %v813, 2
    %v1179 = vsel %vm1067, %v1178, %v1177
    %v1180 = vrot.slane %v887, 1
    %v1181 = vsel %vm1070, %v1180, %v1179
    %v1182 = vsel %vm1073, %v961, %v1181
    %v1183 = vrot.slane %v1035, 7
    %v1184 = vsel %vm1076, %v1183, %v1182
    %1185 = vrot.lane.b32.xlu0 %v1184, 64
    %v1186 = vpop.permute.xlu0 %1185
    %1188 = vst.msk [vmem:[#allocation2 + $0x8] sm:$0xff] %vm1116, %v1186
    %v1189 = vrot.slane %v517, 7
    %v1190 = vrot.slane %v591, 6
    %v1191 = vsel %vm1058, %v1190, %v1189
    %v1192 = vrot.slane %v665, 5
    %v1193 = vsel %vm1061, %v1192, %v1191
    %v1194 = vrot.slane %v739, 4
    %v1195 = vsel %vm1064, %v1194, %v1193
    %v1196 = vrot.slane %v813, 3
    %v1197 = vsel %vm1067, %v1196, %v1195
    %v1198 = vrot.slane %v887, 2
    %v1199 = vsel %vm1070, %v1198, %v1197
    %v1200 = vrot.slane %v961, 1
    %v1201 = vsel %vm1073, %v1200, %v1199
    %v1202 = vsel %vm1076, %v1035, %v1201
    %1203 = vrot.lane.b32.xlu0 %v1202, 96
    %v1204 = vpop.permute.xlu0 %1203
    %1206 = vst.msk [vmem:[#allocation2 + $0x8] sm:$0xff] %vm1135, %v1204
    %v1215 = vrot.slane %v594, 7
    %v1216 = vsel %vm1058, %v1215, %v520
    %v1217 = vrot.slane %v668, 6
    %v1218 = vsel %vm1061, %v1217, %v1216
    %v1219 = vrot.slane %v742, 5
    %v1220 = vsel %vm1064, %v1219, %v1218
    %v1221 = vrot.slane %v816, 4
    %v1222 = vsel %vm1067, %v1221, %v1220
    %v1223 = vrot.slane %v890, 3
    %v1224 = vsel %vm1070, %v1223, %v1222
    %v1225 = vrot.slane %v964, 2
    %v1226 = vsel %vm1073, %v1225, %v1224
    %v1227 = vrot.slane %v1038, 1
    %v1228 = vsel %vm1076, %v1227, %v1226
    %1230 = vst.msk [vmem:[#allocation2 + $0x10] sm:$0xff] %vm76, %v1228
    %v1231 = vrot.slane %v520, 1
    %v1232 = vsel %vm1058, %v594, %v1231
    %v1233 = vrot.slane %v668, 7
    %v1234 = vsel %vm1061, %v1233, %v1232
    %v1235 = vrot.slane %v742, 6
    %v1236 = vsel %vm1064, %v1235, %v1234
    %v1237 = vrot.slane %v816, 5
    %v1238 = vsel %vm1067, %v1237, %v1236
    %v1239 = vrot.slane %v890, 4
    %v1240 = vsel %vm1070, %v1239, %v1238
    %v1241 = vrot.slane %v964, 3
    %v1242 = vsel %vm1073, %v1241, %v1240
    %v1243 = vrot.slane %v1038, 2
    %v1244 = vsel %vm1076, %v1243, %v1242
    %1245 = vrot.lane.b32.xlu0 %v1244, 32
    %v1246 = vpop.permute.xlu0 %1245
    %1248 = vst.msk [vmem:[#allocation2 + $0x10] sm:$0xff] %vm1097, %v1246
    %v1249 = vrot.slane %v520, 2
    %v1250 = vrot.slane %v594, 1
    %v1251 = vsel %vm1058, %v1250, %v1249
    %v1252 = vsel %vm1061, %v668, %v1251
    %v1253 = vrot.slane %v742, 7
    %v1254 = vsel %vm1064, %v1253, %v1252
    %v1255 = vrot.slane %v816, 6
    %v1256 = vsel %vm1067, %v1255, %v1254
    %v1257 = vrot.slane %v890, 5
    %v1258 = vsel %vm1070, %v1257, %v1256
    %v1259 = vrot.slane %v964, 4
    %v1260 = vsel %vm1073, %v1259, %v1258
    %v1261 = vrot.slane %v1038, 3
    %v1262 = vsel %vm1076, %v1261, %v1260
    %1263 = vrot.lane.b32.xlu0 %v1262, 64
    %v1264 = vpop.permute.xlu0 %1263
    %1266 = vst.msk [vmem:[#allocation2 + $0x10] sm:$0xff] %vm1116, %v1264
    %v1267 = vrot.slane %v520, 3
    %v1268 = vrot.slane %v594, 2
    %v1269 = vsel %vm1058, %v1268, %v1267
    %v1270 = vrot.slane %v668, 1
    %v1271 = vsel %vm1061, %v1270, %v1269
    %v1272 = vsel %vm1064, %v742, %v1271
    %v1273 = vrot.slane %v816, 7
    %v1274 = vsel %vm1067, %v1273, %v1272
    %v1275 = vrot.slane %v890, 6
    %v1276 = vsel %vm1070, %v1275, %v1274
    %v1277 = vrot.slane %v964, 5
    %v1278 = vsel %vm1073, %v1277, %v1276
    %v1279 = vrot.slane %v1038, 4
    %v1280 = vsel %vm1076, %v1279, %v1278
    %1281 = vrot.lane.b32.xlu0 %v1280, 96
    %v1282 = vpop.permute.xlu0 %1281
    %1284 = vst.msk [vmem:[#allocation2 + $0x10] sm:$0xff] %vm1135, %v1282
    %v1285 = vrot.slane %v520, 4
    %v1286 = vrot.slane %v594, 3
    %v1287 = vsel %vm1058, %v1286, %v1285
    %v1288 = vrot.slane %v668, 2
    %v1289 = vsel %vm1061, %v1288, %v1287
    %v1290 = vrot.slane %v742, 1
    %v1291 = vsel %vm1064, %v1290, %v1289
    %v1292 = vsel %vm1067, %v816, %v1291
    %v1293 = vrot.slane %v890, 7
    %v1294 = vsel %vm1070, %v1293, %v1292
    %v1295 = vrot.slane %v964, 6
    %v1296 = vsel %vm1073, %v1295, %v1294
    %v1297 = vrot.slane %v1038, 5
    %v1298 = vsel %vm1076, %v1297, %v1296
    %1300 = vst.msk [vmem:[#allocation2 + $0x18] sm:$0xff] %vm76, %v1298
    %v1301 = vrot.slane %v520, 5
    %v1302 = vrot.slane %v594, 4
    %v1303 = vsel %vm1058, %v1302, %v1301
    %v1304 = vrot.slane %v668, 3
    %v1305 = vsel %vm1061, %v1304, %v1303
    %v1306 = vrot.slane %v742, 2
    %v1307 = vsel %vm1064, %v1306, %v1305
    %v1308 = vrot.slane %v816, 1
    %v1309 = vsel %vm1067, %v1308, %v1307
    %v1310 = vsel %vm1070, %v890, %v1309
    %v1311 = vrot.slane %v964, 7
    %v1312 = vsel %vm1073, %v1311, %v1310
    %v1313 = vrot.slane %v1038, 6
    %v1314 = vsel %vm1076, %v1313, %v1312
    %1315 = vrot.lane.b32.xlu0 %v1314, 32
    %v1316 = vpop.permute.xlu0 %1315
    %1318 = vst.msk [vmem:[#allocation2 + $0x18] sm:$0xff] %vm1097, %v1316
    %v1319 = vrot.slane %v520, 6
    %v1320 = vrot.slane %v594, 5
    %v1321 = vsel %vm1058, %v1320, %v1319
    %v1322 = vrot.slane %v668, 4
    %v1323 = vsel %vm1061, %v1322, %v1321
    %v1324 = vrot.slane %v742, 3
    %v1325 = vsel %vm1064, %v1324, %v1323
    %v1326 = vrot.slane %v816, 2
    %v1327 = vsel %vm1067, %v1326, %v1325
    %v1328 = vrot.slane %v890, 1
    %v1329 = vsel %vm1070, %v1328, %v1327
    %v1330 = vsel %vm1073, %v964, %v1329
    %v1331 = vrot.slane %v1038, 7
    %v1332 = vsel %vm1076, %v1331, %v1330
    %1333 = vrot.lane.b32.xlu0 %v1332, 64
    %v1334 = vpop.permute.xlu0 %1333
    %1336 = vst.msk [vmem:[#allocation2 + $0x18] sm:$0xff] %vm1116, %v1334
    %v1337 = vrot.slane %v520, 7
    %v1338 = vrot.slane %v594, 6
    %v1339 = vsel %vm1058, %v1338, %v1337
    %v1340 = vrot.slane %v668, 5
    %v1341 = vsel %vm1061, %v1340, %v1339
    %v1342 = vrot.slane %v742, 4
    %v1343 = vsel %vm1064, %v1342, %v1341
    %v1344 = vrot.slane %v816, 3
    %v1345 = vsel %vm1067, %v1344, %v1343
    %v1346 = vrot.slane %v890, 2
    %v1347 = vsel %vm1070, %v1346, %v1345
    %v1348 = vrot.slane %v964, 1
    %v1349 = vsel %vm1073, %v1348, %v1347
    %v1350 = vsel %vm1076, %v1038, %v1349
    %1351 = vrot.lane.b32.xlu0 %v1350, 96
    %v1352 = vpop.permute.xlu0 %1351
    %1354 = vst.msk [vmem:[#allocation2 + $0x18] sm:$0xff] %vm1135, %v1352
    %v1363 = vrot.slane %v599, 7
    %v1364 = vsel %vm1058, %v1363, %v525
    %v1365 = vrot.slane %v673, 6
    %v1366 = vsel %vm1061, %v1365, %v1364
    %v1367 = vrot.slane %v747, 5
    %v1368 = vsel %vm1064, %v1367, %v1366
    %v1369 = vrot.slane %v821, 4
    %v1370 = vsel %vm1067, %v1369, %v1368
    %v1371 = vrot.slane %v895, 3
    %v1372 = vsel %vm1070, %v1371, %v1370
    %v1373 = vrot.slane %v969, 2
    %v1374 = vsel %vm1073, %v1373, %v1372
    %v1375 = vrot.slane %v1043, 1
    %v1376 = vsel %vm1076, %v1375, %v1374
    %1378 = vst.msk [vmem:[#allocation2 + $0x20] sm:$0xff] %vm76, %v1376
    %v1379 = vrot.slane %v525, 1
    %v1380 = vsel %vm1058, %v599, %v1379
    %v1381 = vrot.slane %v673, 7
    %v1382 = vsel %vm1061, %v1381, %v1380
    %v1383 = vrot.slane %v747, 6
    %v1384 = vsel %vm1064, %v1383, %v1382
    %v1385 = vrot.slane %v821, 5
    %v1386 = vsel %vm1067, %v1385, %v1384
    %v1387 = vrot.slane %v895, 4
    %v1388 = vsel %vm1070, %v1387, %v1386
    %v1389 = vrot.slane %v969, 3
    %v1390 = vsel %vm1073, %v1389, %v1388
    %v1391 = vrot.slane %v1043, 2
    %v1392 = vsel %vm1076, %v1391, %v1390
    %1393 = vrot.lane.b32.xlu0 %v1392, 32
    %v1394 = vpop.permute.xlu0 %1393
    %1396 = vst.msk [vmem:[#allocation2 + $0x20] sm:$0xff] %vm1097, %v1394
    %v1397 = vrot.slane %v525, 2
    %v1398 = vrot.slane %v599, 1
    %v1399 = vsel %vm1058, %v1398, %v1397
    %v1400 = vsel %vm1061, %v673, %v1399
    %v1401 = vrot.slane %v747, 7
    %v1402 = vsel %vm1064, %v1401, %v1400
    %v1403 = vrot.slane %v821, 6
    %v1404 = vsel %vm1067, %v1403, %v1402
    %v1405 = vrot.slane %v895, 5
    %v1406 = vsel %vm1070, %v1405, %v1404
    %v1407 = vrot.slane %v969, 4
    %v1408 = vsel %vm1073, %v1407, %v1406
    %v1409 = vrot.slane %v1043, 3
    %v1410 = vsel %vm1076, %v1409, %v1408
    %1411 = vrot.lane.b32.xlu0 %v1410, 64
    %v1412 = vpop.permute.xlu0 %1411
    %1414 = vst.msk [vmem:[#allocation2 + $0x20] sm:$0xff] %vm1116, %v1412
    %v1415 = vrot.slane %v525, 3
    %v1416 = vrot.slane %v599, 2
    %v1417 = vsel %vm1058, %v1416, %v1415
    %v1418 = vrot.slane %v673, 1
    %v1419 = vsel %vm1061, %v1418, %v1417
    %v1420 = vsel %vm1064, %v747, %v1419
    %v1421 = vrot.slane %v821, 7
    %v1422 = vsel %vm1067, %v1421, %v1420
    %v1423 = vrot.slane %v895, 6
    %v1424 = vsel %vm1070, %v1423, %v1422
    %v1425 = vrot.slane %v969, 5
    %v1426 = vsel %vm1073, %v1425, %v1424
    %v1427 = vrot.slane %v1043, 4
    %v1428 = vsel %vm1076, %v1427, %v1426
    %1429 = vrot.lane.b32.xlu0 %v1428, 96
    %v1430 = vpop.permute.xlu0 %1429
    %1432 = vst.msk [vmem:[#allocation2 + $0x20] sm:$0xff] %vm1135, %v1430
    %v1433 = vrot.slane %v525, 4
    %v1434 = vrot.slane %v599, 3
    %v1435 = vsel %vm1058, %v1434, %v1433
    %v1436 = vrot.slane %v673, 2
    %v1437 = vsel %vm1061, %v1436, %v1435
    %v1438 = vrot.slane %v747, 1
    %v1439 = vsel %vm1064, %v1438, %v1437
    %v1440 = vsel %vm1067, %v821, %v1439
    %v1441 = vrot.slane %v895, 7
    %v1442 = vsel %vm1070, %v1441, %v1440
    %v1443 = vrot.slane %v969, 6
    %v1444 = vsel %vm1073, %v1443, %v1442
    %v1445 = vrot.slane %v1043, 5
    %v1446 = vsel %vm1076, %v1445, %v1444
    %1448 = vst.msk [vmem:[#allocation2 + $0x28] sm:$0xff] %vm76, %v1446
    %v1449 = vrot.slane %v525, 5
    %v1450 = vrot.slane %v599, 4
    %v1451 = vsel %vm1058, %v1450, %v1449
    %v1452 = vrot.slane %v673, 3
    %v1453 = vsel %vm1061, %v1452, %v1451
    %v1454 = vrot.slane %v747, 2
    %v1455 = vsel %vm1064, %v1454, %v1453
    %v1456 = vrot.slane %v821, 1
    %v1457 = vsel %vm1067, %v1456, %v1455
    %v1458 = vsel %vm1070, %v895, %v1457
    %v1459 = vrot.slane %v969, 7
    %v1460 = vsel %vm1073, %v1459, %v1458
    %v1461 = vrot.slane %v1043, 6
    %v1462 = vsel %vm1076, %v1461, %v1460
    %1463 = vrot.lane.b32.xlu0 %v1462, 32
    %v1464 = vpop.permute.xlu0 %1463
    %1466 = vst.msk [vmem:[#allocation2 + $0x28] sm:$0xff] %vm1097, %v1464
    %v1467 = vrot.slane %v525, 6
    %v1468 = vrot.slane %v599, 5
    %v1469 = vsel %vm1058, %v1468, %v1467
    %v1470 = vrot.slane %v673, 4
    %v1471 = vsel %vm1061, %v1470, %v1469
    %v1472 = vrot.slane %v747, 3
    %v1473 = vsel %vm1064, %v1472, %v1471
    %v1474 = vrot.slane %v821, 2
    %v1475 = vsel %vm1067, %v1474, %v1473
    %v1476 = vrot.slane %v895, 1
    %v1477 = vsel %vm1070, %v1476, %v1475
    %v1478 = vsel %vm1073, %v969, %v1477
    %v1479 = vrot.slane %v1043, 7
    %v1480 = vsel %vm1076, %v1479, %v1478
    %1481 = vrot.lane.b32.xlu0 %v1480, 64
    %v1482 = vpop.permute.xlu0 %1481
    %1484 = vst.msk [vmem:[#allocation2 + $0x28] sm:$0xff] %vm1116, %v1482
    %v1485 = vrot.slane %v525, 7
    %v1486 = vrot.slane %v599, 6
    %v1487 = vsel %vm1058, %v1486, %v1485
    %v1488 = vrot.slane %v673, 5
    %v1489 = vsel %vm1061, %v1488, %v1487
    %v1490 = vrot.slane %v747, 4
    %v1491 = vsel %vm1064, %v1490, %v1489
    %v1492 = vrot.slane %v821, 3
    %v1493 = vsel %vm1067, %v1492, %v1491
    %v1494 = vrot.slane %v895, 2
    %v1495 = vsel %vm1070, %v1494, %v1493
    %v1496 = vrot.slane %v969, 1
    %v1497 = vsel %vm1073, %v1496, %v1495
    %v1498 = vsel %vm1076, %v1043, %v1497
    %1499 = vrot.lane.b32.xlu0 %v1498, 96
    %v1500 = vpop.permute.xlu0 %1499
    %1502 = vst.msk [vmem:[#allocation2 + $0x28] sm:$0xff] %vm1135, %v1500
    %v1511 = vrot.slane %v602, 7
    %v1512 = vsel %vm1058, %v1511, %v528
    %v1513 = vrot.slane %v676, 6
    %v1514 = vsel %vm1061, %v1513, %v1512
    %v1515 = vrot.slane %v750, 5
    %v1516 = vsel %vm1064, %v1515, %v1514
    %v1517 = vrot.slane %v824, 4
    %v1518 = vsel %vm1067, %v1517, %v1516
    %v1519 = vrot.slane %v898, 3
    %v1520 = vsel %vm1070, %v1519, %v1518
    %v1521 = vrot.slane %v972, 2
    %v1522 = vsel %vm1073, %v1521, %v1520
    %v1523 = vrot.slane %v1046, 1
    %v1524 = vsel %vm1076, %v1523, %v1522
    %1526 = vst.msk [vmem:[#allocation2 + $0x30] sm:$0xff] %vm76, %v1524
    %v1527 = vrot.slane %v528, 1
    %v1528 = vsel %vm1058, %v602, %v1527
    %v1529 = vrot.slane %v676, 7
    %v1530 = vsel %vm1061, %v1529, %v1528
    %v1531 = vrot.slane %v750, 6
    %v1532 = vsel %vm1064, %v1531, %v1530
    %v1533 = vrot.slane %v824, 5
    %v1534 = vsel %vm1067, %v1533, %v1532
    %v1535 = vrot.slane %v898, 4
    %v1536 = vsel %vm1070, %v1535, %v1534
    %v1537 = vrot.slane %v972, 3
    %v1538 = vsel %vm1073, %v1537, %v1536
    %v1539 = vrot.slane %v1046, 2
    %v1540 = vsel %vm1076, %v1539, %v1538
    %1541 = vrot.lane.b32.xlu0 %v1540, 32
    %v1542 = vpop.permute.xlu0 %1541
    %1544 = vst.msk [vmem:[#allocation2 + $0x30] sm:$0xff] %vm1097, %v1542
    %v1545 = vrot.slane %v528, 2
    %v1546 = vrot.slane %v602, 1
    %v1547 = vsel %vm1058, %v1546, %v1545
    %v1548 = vsel %vm1061, %v676, %v1547
    %v1549 = vrot.slane %v750, 7
    %v1550 = vsel %vm1064, %v1549, %v1548
    %v1551 = vrot.slane %v824, 6
    %v1552 = vsel %vm1067, %v1551, %v1550
    %v1553 = vrot.slane %v898, 5
    %v1554 = vsel %vm1070, %v1553, %v1552
    %v1555 = vrot.slane %v972, 4
    %v1556 = vsel %vm1073, %v1555, %v1554
    %v1557 = vrot.slane %v1046, 3
    %v1558 = vsel %vm1076, %v1557, %v1556
    %1559 = vrot.lane.b32.xlu0 %v1558, 64
    %v1560 = vpop.permute.xlu0 %1559
    %1562 = vst.msk [vmem:[#allocation2 + $0x30] sm:$0xff] %vm1116, %v1560
    %v1563 = vrot.slane %v528, 3
    %v1564 = vrot.slane %v602, 2
    %v1565 = vsel %vm1058, %v1564, %v1563
    %v1566 = vrot.slane %v676, 1
    %v1567 = vsel %vm1061, %v1566, %v1565
    %v1568 = vsel %vm1064, %v750, %v1567
    %v1569 = vrot.slane %v824, 7
    %v1570 = vsel %vm1067, %v1569, %v1568
    %v1571 = vrot.slane %v898, 6
    %v1572 = vsel %vm1070, %v1571, %v1570
    %v1573 = vrot.slane %v972, 5
    %v1574 = vsel %vm1073, %v1573, %v1572
    %v1575 = vrot.slane %v1046, 4
    %v1576 = vsel %vm1076, %v1575, %v1574
    %1577 = vrot.lane.b32.xlu0 %v1576, 96
    %v1578 = vpop.permute.xlu0 %1577
    %1580 = vst.msk [vmem:[#allocation2 + $0x30] sm:$0xff] %vm1135, %v1578
    %v1581 = vrot.slane %v528, 4
    %v1582 = vrot.slane %v602, 3
    %v1583 = vsel %vm1058, %v1582, %v1581
    %v1584 = vrot.slane %v676, 2
    %v1585 = vsel %vm1061, %v1584, %v1583
    %v1586 = vrot.slane %v750, 1
    %v1587 = vsel %vm1064, %v1586, %v1585
    %v1588 = vsel %vm1067, %v824, %v1587
    %v1589 = vrot.slane %v898, 7
    %v1590 = vsel %vm1070, %v1589, %v1588
    %v1591 = vrot.slane %v972, 6
    %v1592 = vsel %vm1073, %v1591, %v1590
    %v1593 = vrot.slane %v1046, 5
    %v1594 = vsel %vm1076, %v1593, %v1592
    %1596 = vst.msk [vmem:[#allocation2 + $0x38] sm:$0xff] %vm76, %v1594
    %v1597 = vrot.slane %v528, 5
    %v1598 = vrot.slane %v602, 4
    %v1599 = vsel %vm1058, %v1598, %v1597
    %v1600 = vrot.slane %v676, 3
    %v1601 = vsel %vm1061, %v1600, %v1599
    %v1602 = vrot.slane %v750, 2
    %v1603 = vsel %vm1064, %v1602, %v1601
    %v1604 = vrot.slane %v824, 1
    %v1605 = vsel %vm1067, %v1604, %v1603
    %v1606 = vsel %vm1070, %v898, %v1605
    %v1607 = vrot.slane %v972, 7
    %v1608 = vsel %vm1073, %v1607, %v1606
    %v1609 = vrot.slane %v1046, 6
    %v1610 = vsel %vm1076, %v1609, %v1608
    %1611 = vrot.lane.b32.xlu0 %v1610, 32
    %v1612 = vpop.permute.xlu0 %1611
    %1614 = vst.msk [vmem:[#allocation2 + $0x38] sm:$0xff] %vm1097, %v1612
    %v1615 = vrot.slane %v528, 6
    %v1616 = vrot.slane %v602, 5
    %v1617 = vsel %vm1058, %v1616, %v1615
    %v1618 = vrot.slane %v676, 4
    %v1619 = vsel %vm1061, %v1618, %v1617
    %v1620 = vrot.slane %v750, 3
    %v1621 = vsel %vm1064, %v1620, %v1619
    %v1622 = vrot.slane %v824, 2
    %v1623 = vsel %vm1067, %v1622, %v1621
    %v1624 = vrot.slane %v898, 1
    %v1625 = vsel %vm1070, %v1624, %v1623
    %v1626 = vsel %vm1073, %v972, %v1625
    %v1627 = vrot.slane %v1046, 7
    %v1628 = vsel %vm1076, %v1627, %v1626
    %1629 = vrot.lane.b32.xlu0 %v1628, 64
    %v1630 = vpop.permute.xlu0 %1629
    %1632 = vst.msk [vmem:[#allocation2 + $0x38] sm:$0xff] %vm1116, %v1630
    %v1633 = vrot.slane %v528, 7
    %v1634 = vrot.slane %v602, 6
    %v1635 = vsel %vm1058, %v1634, %v1633
    %v1636 = vrot.slane %v676, 5
    %v1637 = vsel %vm1061, %v1636, %v1635
    %v1638 = vrot.slane %v750, 4
    %v1639 = vsel %vm1064, %v1638, %v1637
    %v1640 = vrot.slane %v824, 3
    %v1641 = vsel %vm1067, %v1640, %v1639
    %v1642 = vrot.slane %v898, 2
    %v1643 = vsel %vm1070, %v1642, %v1641
    %v1644 = vrot.slane %v972, 1
    %v1645 = vsel %vm1073, %v1644, %v1643
    %v1646 = vsel %vm1076, %v1046, %v1645
    %1647 = vrot.lane.b32.xlu0 %v1646, 96
    %v1648 = vpop.permute.xlu0 %1647
    %1650 = vst.msk [vmem:[#allocation2 + $0x38] sm:$0xff] %vm1135, %v1648
    // Predicated region
    $region14: #{tpu_custom_call.1} parent=1 // pred_check
      _
    $region15: #{tpu_custom_call.1} parent=1 // pred_check_branch
      %1652 = sbr.rel (0) target = $region17
    $region16: #{tpu_custom_call.1} parent=1 // pred_region
      %s1654 = ssub.s32 1024, 1024
      %1655 = vsyncadd [#allocation3], %s1654
      %s1657 = sshll.u32 [#allocation2], 4
      %s1658 = int_to_ptr.vmem [resolvable:$true] %s1657
      %1660 = dma.vmem_to_hbm [thread:$0]  %s1658, 1024, %s3, [#allocation3]
    $region17: #{tpu_custom_call.1} parent=1 // pred_fallthru
      _
    // Predicated region
    $region18: #{tpu_custom_call.1} parent=1 // pred_check
      _
    $region19: #{tpu_custom_call.1} parent=1 // pred_check_branch
      %1662 = sbr.rel (0) target = $region21
    $region20: #{tpu_custom_call.1} parent=1 // pred_region
      %1663 = dma.done [#allocation3], 1024
    $region21: #{tpu_custom_call.1} parent=1 // pred_fallthru
      _
    %1664 = vsyncpa [#allocation3], 1

</llo_original>
